<compile_context>
chip_gen: v6e
topology: v6e:2x2x1
jax: 0.10.0
libtpu: 0.0.40
codegen_flags: <defaults>
</compile_context>

<pallas_src>
import math
import jax
import jax.numpy as jnp
from jax import lax
from jax.experimental import pallas as pl
from jax.experimental.pallas import tpu as pltpu

# ---------------- small test configuration ----------------
B = 2              # batch
T = 16             # sequence length
N_EMBD = 128       # n_embd (lane-dense)
N_HEAD = 8
HEAD_DIM = N_EMBD // N_HEAD
LN_EPS = 1e-5
NEG_MASK = -1e30   # finite mask value; exp underflows to exactly 0 in f32


# ---------------- in-kernel math helpers ----------------
def _erf(x):
    # Abramowitz & Stegun 7.1.26, |err| < 1.5e-7 (f32-level accuracy).
    # TODO(synk): switch to lax.erf if/when Mosaic exposes an EUP erf lowering.
    a1, a2, a3, a4, a5 = 0.254829592, -0.284496736, 1.421413741, -1.453152027, 1.061405429
    p = 0.3275911
    ax = jnp.abs(x)
    t = 1.0 / (1.0 + p * ax)
    poly = ((((a5 * t + a4) * t + a3) * t + a2) * t + a1) * t
    y = 1.0 - poly * jnp.exp(-ax * ax)
    return jnp.where(x < 0.0, -y, y)


def _gelu_exact(x):
    # nn.GELU() default (erf form) kept for exact semantics.
    return 0.5 * x * (1.0 + _erf(x * 0.7071067811865476))


def _layernorm(x, w):
    # F.layer_norm over last dim, eps=1e-5, weight only (bias=False).
    mu = jnp.mean(x, axis=-1, keepdims=True)
    var = jnp.mean((x - mu) ** 2, axis=-1, keepdims=True)
    return (x - mu) * lax.rsqrt(var + LN_EPS) * w


# ---------------- fused Block kernel ----------------
def block_kernel(x_ref, ln1w_ref, wqkv_ref, bias_ref, hmask_ref, wproj_ref,
                 ln2w_ref, wfc_ref, wfcp_ref, o_ref):
    x = x_ref[0]                              # (T, C) f32
    t, c = x.shape
    nh = hmask_ref.shape[0] // t              # number of heads

    # ---- causal self-attention ----
    xn = _layernorm(x, ln1w_ref[...])
    # fused QKV projection: one lane-dense (T,C)@(C,3C) bf16 MXU op.
    qkv = jnp.dot(xn.astype(jnp.bfloat16), wqkv_ref[...],
                  preferred_element_type=jnp.float32)           # (T, 3C) f32
    q = qkv[:, :c]                # 1/sqrt(head_dim) already folded into Wq
    k = qkv[:, c:2 * c]
    v = qkv[:, 2 * c:]

    # Pack heads into rows (row r = h*T + t) by tiling; the 0/1 head-channel
    # mask on the tiled Q makes the full-width matmul yield per-head scores on
    # the same-head blocks (other columns are killed by the additive bias).
    hm = hmask_ref[...]                                         # (H*T, C) 0/1 f32
    qrep = jnp.concatenate([q] * nh, axis=0) * hm               # (H*T, C)
    krep = jnp.concatenate([k] * nh, axis=0)                    # (H*T, C)
    vrep = jnp.concatenate([v] * nh, axis=0)                    # (H*T, C)

    att = jnp.einsum('rc,sc->rs',
                     qrep.astype(jnp.bfloat16), krep.astype(jnp.bfloat16),
                     preferred_element_type=jnp.float32)        # (H*T, H*T)
    att = att + bias_ref[...]        # causal + same-head additive mask (0 / NEG_MASK)

    # softmax over lane-dense 128-wide rows (diagonal is never masked -> NaN-safe)
    m = jnp.max(att, axis=-1, keepdims=True)
    e = jnp.exp(att - m)
    p = e * pl.reciprocal(jnp.sum(e, axis=-1, keepdims=True), approx=True)

    yw = jnp.dot(p.astype(jnp.bfloat16), vrep.astype(jnp.bfloat16),
                 preferred_element_type=jnp.float32)            # (H*T, C)
    yw = yw * hm                     # keep each row-block's own head columns
    # merge heads: sum the H row blocks -> (T, C) concat-head layout
    y = yw[0:t, :]
    for h in range(1, nh):
        y = y + yw[h * t:(h + 1) * t, :]

    # output projection: single full-depth (T,C)@(C,C) matmul
    x1 = x + jnp.dot(y.astype(jnp.bfloat16), wproj_ref[...],
                     preferred_element_type=jnp.float32)

    # ---- MLP: fc -> exact GELU -> proj (dropout p=0 is a no-op) ----
    xn2 = _layernorm(x1, ln2w_ref[...])
    h1 = _gelu_exact(jnp.dot(xn2.astype(jnp.bfloat16), wfc_ref[...],
                             preferred_element_type=jnp.float32))
    x2 = x1 + jnp.dot(h1.astype(jnp.bfloat16), wfcp_ref[...],
                      preferred_element_type=jnp.float32)

    o_ref[0] = x2


def block_forward(x, kp):
    Bb, Tt, Cc = x.shape

    def const_spec(a):
        shape = a.shape
        return pl.BlockSpec(shape, lambda b, _n=len(shape): (0,) * _n)

    return pl.pallas_call(
        block_kernel,
        out_shape=jax.ShapeDtypeStruct((Bb, Tt, Cc), jnp.float32),
        grid_spec=pltpu.PrefetchScalarGridSpec(
            num_scalar_prefetch=0,
            grid=(Bb,),
            in_specs=[
                pl.BlockSpec((1, Tt, Cc), lambda b: (b, 0, 0)),
                const_spec(kp['ln1_w']),
                const_spec(kp['w_qkv']),
                const_spec(kp['attn_bias']),
                const_spec(kp['head_mask']),
                const_spec(kp['w_proj']),
                const_spec(kp['ln2_w']),
                const_spec(kp['w_fc']),
                const_spec(kp['w_fcp']),
            ],
            out_specs=pl.BlockSpec((1, Tt, Cc), lambda b: (b, 0, 0)),
        ),
        # "parallel" batch axis feeds both TensorCores on v7x; negligible cost
        # on single-TC v5e/v6e at B=2 (could fold B into the block there).
        compiler_params=pltpu.CompilerParams(dimension_semantics=("parallel",)),
    )(x, kp['ln1_w'], kp['w_qkv'], kp['attn_bias'], kp['head_mask'],
      kp['w_proj'], kp['ln2_w'], kp['w_fc'], kp['w_fcp'])


# ---------------- parameters (deterministic, synthetic) ----------------
def init_params(key):
    k = jax.random.split(key, 4)

    def nrm(kk, shape, scale=0.02):
        return (scale * jax.random.normal(kk, shape)).astype(jnp.float32)

    return dict(
        ln1_w=jnp.ones((1, N_EMBD), jnp.float32),
        attn_w_t=nrm(k[0], (N_EMBD, 3 * N_EMBD)),      # c_attn.weight.T
        proj_w_t=nrm(k[1], (N_EMBD, N_EMBD)),          # c_proj.weight.T
        ln2_w=jnp.ones((1, N_EMBD), jnp.float32),
        fc_w_t=nrm(k[2], (N_EMBD, 4 * N_EMBD)),        # c_fc.weight.T
        fcproj_w_t=nrm(k[3], (4 * N_EMBD, N_EMBD)),    # mlp c_proj.weight.T
    )


def prepare_kernel_params(p):
    """One-time (outside-kernel) weight re-layout / casting and mask constants."""
    C, H, hd, Tn = N_EMBD, N_HEAD, HEAD_DIM, T

    # fold the 1/sqrt(head_dim) attention scale into Wq (one-time weight scale)
    wq = p['attn_w_t'][:, :C] * (1.0 / math.sqrt(hd))
    w_qkv = jnp.concatenate([wq, p['attn_w_t'][:, C:2 * C], p['attn_w_t'][:, 2 * C:]],
                            axis=1)

    # packed-heads masks: row index r = h*T + t
    ridx = jnp.arange(H * Tn)
    rh, rt = ridx // Tn, ridx % Tn
    same_head = rh[:, None] == rh[None, :]
    causal = rt[None, :] <= rt[:, None]
    attn_bias = jnp.where(same_head & causal, 0.0, NEG_MASK).astype(jnp.float32)
    ch = jnp.arange(C) // hd
    head_mask = (rh[:, None] == ch[None, :]).astype(jnp.float32)     # (H*T, C)

    return dict(
        ln1_w=p['ln1_w'],
        w_qkv=w_qkv.astype(jnp.bfloat16),
        attn_bias=attn_bias,
        head_mask=head_mask,
        w_proj=p['proj_w_t'].astype(jnp.bfloat16),
        ln2_w=p['ln2_w'],
        w_fc=p['fc_w_t'].astype(jnp.bfloat16),
        w_fcp=p['fcproj_w_t'].astype(jnp.bfloat16),
    )


# ---------------- pure-JAX reference (for correctness check) ----------------
def block_reference(x, p):
    Bb, Tt, Cc = x.shape
    H, hd = N_HEAD, HEAD_DIM

    def ln(v, w):
        mu = jnp.mean(v, axis=-1, keepdims=True)
        var = jnp.mean((v - mu) ** 2, axis=-1, keepdims=True)
        return (v - mu) / jnp.sqrt(var + LN_EPS) * w

    xn = ln(x, p['ln1_w'])
    qkv = xn @ p['attn_w_t']
    q, k, v = jnp.split(qkv, 3, axis=-1)

    def heads(a):
        return jnp.transpose(a.reshape(Bb, Tt, H, hd), (0, 2, 1, 3))

    q, k, v = heads(q), heads(k), heads(v)
    att = jnp.einsum('bhqd,bhkd->bhqk', q, k) / math.sqrt(hd)
    mask = jnp.tril(jnp.ones((Tt, Tt), dtype=bool))
    att = jnp.where(mask[None, None], att, -jnp.inf)
    att = jax.nn.softmax(att, axis=-1)
    y = jnp.einsum('bhqk,bhkd->bhqd', att, v)
    y = jnp.transpose(y, (0, 2, 1, 3)).reshape(Bb, Tt, Cc)
    x = x + y @ p['proj_w_t']

    xn2 = ln(x, p['ln2_w'])
    h = jax.nn.gelu(xn2 @ p['fc_w_t'], approximate=False)
    x = x + h @ p['fcproj_w_t']
    return x


if __name__ == "__main__":
    key = jax.random.PRNGKey(0)
    pkey, xkey = jax.random.split(key)
    params = init_params(pkey)
    x = jax.random.normal(xkey, (B, T, N_EMBD), dtype=jnp.float32)

    kparams = prepare_kernel_params(params)
    out = jax.block_until_ready(jax.jit(block_forward)(x, kparams))

    assert out.shape == (B, T, N_EMBD)
    assert bool(jnp.all(jnp.isfinite(out)))

    ref = block_reference(x, params)
    max_err = float(jnp.max(jnp.abs(out - ref)))
    # bf16 MXU operands + approx softmax reciprocal vs. the all-f32 reference.
    assert max_err < 2e-2, f"kernel/reference mismatch: {max_err}"
    print("KERNEL_OK")
</pallas_src>

<mosaic_0001>
module attributes {stable_mosaic.version = 11 : i64} {
  func.func @block_kernel(%arg0: i32, %arg1: memref<1x16x128xf32, #tpu.memory_space<vmem>>, %arg2: memref<1x128xf32, #tpu.memory_space<vmem>>, %arg3: memref<128x384xbf16, #tpu.memory_space<vmem>>, %arg4: memref<128x128xf32, #tpu.memory_space<vmem>>, %arg5: memref<128x128xf32, #tpu.memory_space<vmem>>, %arg6: memref<128x128xbf16, #tpu.memory_space<vmem>>, %arg7: memref<1x128xf32, #tpu.memory_space<vmem>>, %arg8: memref<128x512xbf16, #tpu.memory_space<vmem>>, %arg9: memref<512x128xbf16, #tpu.memory_space<vmem>>, %arg10: memref<1x16x128xf32, #tpu.memory_space<vmem>>) attributes {dimension_semantics = [#tpu.dimension_semantics<parallel>], iteration_bounds = array<i64: 2>, scalar_prefetch = 0 : i64, scratch_operands = 0 : i64, tpu.core_type = #tpu.core_type<tc>, window_params = [{transform_indices = @transform_0, window_bounds = array<i64: 1, 16, 128>}, {pipeline_mode = #tpu.pipeline_mode<synchronous>, transform_indices = @transform_1, window_bounds = array<i64: 1, 128>}, {pipeline_mode = #tpu.pipeline_mode<synchronous>, transform_indices = @transform_2, window_bounds = array<i64: 128, 384>}, {pipeline_mode = #tpu.pipeline_mode<synchronous>, transform_indices = @transform_3, window_bounds = array<i64: 128, 128>}, {pipeline_mode = #tpu.pipeline_mode<synchronous>, transform_indices = @transform_4, window_bounds = array<i64: 128, 128>}, {pipeline_mode = #tpu.pipeline_mode<synchronous>, transform_indices = @transform_5, window_bounds = array<i64: 128, 128>}, {pipeline_mode = #tpu.pipeline_mode<synchronous>, transform_indices = @transform_6, window_bounds = array<i64: 1, 128>}, {pipeline_mode = #tpu.pipeline_mode<synchronous>, transform_indices = @transform_7, window_bounds = array<i64: 128, 512>}, {pipeline_mode = #tpu.pipeline_mode<synchronous>, transform_indices = @transform_8, window_bounds = array<i64: 512, 128>}, {transform_indices = @transform_9, window_bounds = array<i64: 1, 16, 128>}]} {
    %c0 = arith.constant 0 : index
    %c0_0 = arith.constant 0 : index
    %c0_1 = arith.constant 0 : index
    %0 = vector.load %arg1[%c0, %c0_0, %c0_1] : memref<1x16x128xf32, #tpu.memory_space<vmem>>, vector<1x16x128xf32>
    %1 = vector.shape_cast %0 : vector<1x16x128xf32> to vector<16x128xf32>
    %c0_2 = arith.constant 0 : index
    %c0_3 = arith.constant 0 : index
    %2 = vector.load %arg2[%c0_2, %c0_3] : memref<1x128xf32, #tpu.memory_space<vmem>>, vector<1x128xf32>
    %cst = arith.constant dense<0.000000e+00> : vector<16xf32>
    %3 = vector.multi_reduction <add>, %1, %cst [1] : vector<16x128xf32> to vector<16xf32>
    %4 = vector.shape_cast %3 : vector<16xf32> to vector<16x1xf32>
    %cst_4 = arith.constant 1.280000e+02 : f32
    %5 = vector.broadcast %cst_4 : f32 to vector<16x1xf32>
    %6 = arith.divf %4, %5 : vector<16x1xf32>
    %7 = vector.broadcast %6 : vector<16x1xf32> to vector<16x128xf32>
    %8 = arith.subf %1, %7 : vector<16x128xf32>
    %9 = arith.mulf %8, %8 : vector<16x128xf32>
    %cst_5 = arith.constant dense<0.000000e+00> : vector<16xf32>
    %10 = vector.multi_reduction <add>, %9, %cst_5 [1] : vector<16x128xf32> to vector<16xf32>
    %11 = vector.shape_cast %10 : vector<16xf32> to vector<16x1xf32>
    %cst_6 = arith.constant 1.280000e+02 : f32
    %12 = vector.broadcast %cst_6 : f32 to vector<16x1xf32>
    %13 = arith.divf %11, %12 : vector<16x1xf32>
    %14 = vector.broadcast %6 : vector<16x1xf32> to vector<16x128xf32>
    %15 = arith.subf %1, %14 : vector<16x128xf32>
    %cst_7 = arith.constant 9.99999974E-6 : f32
    %16 = vector.broadcast %cst_7 : f32 to vector<16x1xf32>
    %17 = arith.addf %13, %16 : vector<16x1xf32>
    %18 = math.rsqrt %17 : vector<16x1xf32>
    %19 = vector.broadcast %18 : vector<16x1xf32> to vector<16x128xf32>
    %20 = arith.mulf %15, %19 : vector<16x128xf32>
    %21 = vector.broadcast %2 : vector<1x128xf32> to vector<16x128xf32>
    %22 = arith.mulf %20, %21 : vector<16x128xf32>
    %23 = arith.truncf %22 : vector<16x128xf32> to vector<16x128xbf16>
    %c0_8 = arith.constant 0 : index
    %c0_9 = arith.constant 0 : index
    %24 = vector.load %arg3[%c0_8, %c0_9] : memref<128x384xbf16, #tpu.memory_space<vmem>>, vector<128x384xbf16>
    %cst_10 = arith.constant dense<0.000000e+00> : vector<16x384xf32>
    %25 = tpu.matmul %23, %24, %cst_10 {dimension_numbers = #tpu.dot_dimension_numbers<[1], [0], [0], [1], [0, 0, 1, 1], [], []>} : vector<16x128xbf16>, vector<128x384xbf16>, vector<16x384xf32> -> vector<16x384xf32>
    %26 = vector.extract_strided_slice %25 {offsets = [0, 0], sizes = [16, 128], strides = [1, 1]} : vector<16x384xf32> to vector<16x128xf32>
    %27 = vector.extract_strided_slice %25 {offsets = [0, 128], sizes = [16, 128], strides = [1, 1]} : vector<16x384xf32> to vector<16x128xf32>
    %28 = vector.extract_strided_slice %25 {offsets = [0, 256], sizes = [16, 128], strides = [1, 1]} : vector<16x384xf32> to vector<16x128xf32>
    %c0_11 = arith.constant 0 : index
    %c0_12 = arith.constant 0 : index
    %29 = vector.load %arg5[%c0_11, %c0_12] : memref<128x128xf32, #tpu.memory_space<vmem>>, vector<128x128xf32>
    %30 = tpu.concatenate %26, %26, %26, %26, %26, %26, %26, %26 in 0 : vector<16x128xf32>, vector<16x128xf32>, vector<16x128xf32>, vector<16x128xf32>, vector<16x128xf32>, vector<16x128xf32>, vector<16x128xf32>, vector<16x128xf32> -> vector<128x128xf32>
    %31 = arith.mulf %30, %29 : vector<128x128xf32>
    %32 = tpu.concatenate %27, %27, %27, %27, %27, %27, %27, %27 in 0 : vector<16x128xf32>, vector<16x128xf32>, vector<16x128xf32>, vector<16x128xf32>, vector<16x128xf32>, vector<16x128xf32>, vector<16x128xf32>, vector<16x128xf32> -> vector<128x128xf32>
    %33 = tpu.concatenate %28, %28, %28, %28, %28, %28, %28, %28 in 0 : vector<16x128xf32>, vector<16x128xf32>, vector<16x128xf32>, vector<16x128xf32>, vector<16x128xf32>, vector<16x128xf32>, vector<16x128xf32>, vector<16x128xf32> -> vector<128x128xf32>
    %34 = arith.truncf %31 : vector<128x128xf32> to vector<128x128xbf16>
    %35 = arith.truncf %32 : vector<128x128xf32> to vector<128x128xbf16>
    "tpu.trace_start"() <{level = 10 : i32, message = "rc,sc->rs"}> : () -> ()
    %cst_13 = arith.constant dense<0.000000e+00> : vector<128x128xf32>
    %36 = tpu.matmul %34, %35, %cst_13 {dimension_numbers = #tpu.dot_dimension_numbers<[1], [1], [0], [0], [0, 0, 1, 0], [], []>} : vector<128x128xbf16>, vector<128x128xbf16>, vector<128x128xf32> -> vector<128x128xf32>
    "tpu.trace_stop"() : () -> ()
    %c0_14 = arith.constant 0 : index
    %c0_15 = arith.constant 0 : index
    %37 = vector.load %arg4[%c0_14, %c0_15] : memref<128x128xf32, #tpu.memory_space<vmem>>, vector<128x128xf32>
    %38 = arith.addf %36, %37 : vector<128x128xf32>
    %cst_16 = arith.constant dense<0xFF800000> : vector<128xf32>
    %39 = vector.multi_reduction <maximumf>, %38, %cst_16 [1] : vector<128x128xf32> to vector<128xf32>
    %40 = vector.shape_cast %39 : vector<128xf32> to vector<128x1xf32>
    %41 = vector.broadcast %40 : vector<128x1xf32> to vector<128x128xf32>
    %42 = arith.subf %38, %41 : vector<128x128xf32>
    %43 = math.exp %42 : vector<128x128xf32>
    %cst_17 = arith.constant dense<0.000000e+00> : vector<128xf32>
    %44 = vector.multi_reduction <add>, %43, %cst_17 [1] : vector<128x128xf32> to vector<128xf32>
    %45 = vector.shape_cast %44 : vector<128xf32> to vector<128x1xf32>
    %46 = tpu.reciprocal %45 {approx = true} : vector<128x1xf32> -> vector<128x1xf32>
    %47 = vector.broadcast %46 : vector<128x1xf32> to vector<128x128xf32>
    %48 = arith.mulf %43, %47 : vector<128x128xf32>
    %49 = arith.truncf %48 : vector<128x128xf32> to vector<128x128xbf16>
    %50 = arith.truncf %33 : vector<128x128xf32> to vector<128x128xbf16>
    %cst_18 = arith.constant dense<0.000000e+00> : vector<128x128xf32>
    %51 = tpu.matmul %49, %50, %cst_18 {dimension_numbers = #tpu.dot_dimension_numbers<[1], [0], [0], [1], [0, 0, 1, 1], [], []>} : vector<128x128xbf16>, vector<128x128xbf16>, vector<128x128xf32> -> vector<128x128xf32>
    %52 = arith.mulf %51, %29 : vector<128x128xf32>
    %53 = vector.extract_strided_slice %52 {offsets = [0, 0], sizes = [16, 128], strides = [1, 1]} : vector<128x128xf32> to vector<16x128xf32>
    %54 = vector.extract_strided_slice %52 {offsets = [16, 0], sizes = [16, 128], strides = [1, 1]} : vector<128x128xf32> to vector<16x128xf32>
    %55 = arith.addf %53, %54 : vector<16x128xf32>
    %56 = vector.extract_strided_slice %52 {offsets = [32, 0], sizes = [16, 128], strides = [1, 1]} : vector<128x128xf32> to vector<16x128xf32>
    %57 = arith.addf %55, %56 : vector<16x128xf32>
    %58 = vector.extract_strided_slice %52 {offsets = [48, 0], sizes = [16, 128], strides = [1, 1]} : vector<128x128xf32> to vector<16x128xf32>
    %59 = arith.addf %57, %58 : vector<16x128xf32>
    %60 = vector.extract_strided_slice %52 {offsets = [64, 0], sizes = [16, 128], strides = [1, 1]} : vector<128x128xf32> to vector<16x128xf32>
    %61 = arith.addf %59, %60 : vector<16x128xf32>
    %62 = vector.extract_strided_slice %52 {offsets = [80, 0], sizes = [16, 128], strides = [1, 1]} : vector<128x128xf32> to vector<16x128xf32>
    %63 = arith.addf %61, %62 : vector<16x128xf32>
    %64 = vector.extract_strided_slice %52 {offsets = [96, 0], sizes = [16, 128], strides = [1, 1]} : vector<128x128xf32> to vector<16x128xf32>
    %65 = arith.addf %63, %64 : vector<16x128xf32>
    %66 = vector.extract_strided_slice %52 {offsets = [112, 0], sizes = [16, 128], strides = [1, 1]} : vector<128x128xf32> to vector<16x128xf32>
    %67 = arith.addf %65, %66 : vector<16x128xf32>
    %68 = arith.truncf %67 : vector<16x128xf32> to vector<16x128xbf16>
    %c0_19 = arith.constant 0 : index
    %c0_20 = arith.constant 0 : index
    %69 = vector.load %arg6[%c0_19, %c0_20] : memref<128x128xbf16, #tpu.memory_space<vmem>>, vector<128x128xbf16>
    %cst_21 = arith.constant dense<0.000000e+00> : vector<16x128xf32>
    %70 = tpu.matmul %68, %69, %cst_21 {dimension_numbers = #tpu.dot_dimension_numbers<[1], [0], [0], [1], [0, 0, 1, 1], [], []>} : vector<16x128xbf16>, vector<128x128xbf16>, vector<16x128xf32> -> vector<16x128xf32>
    %71 = arith.addf %1, %70 : vector<16x128xf32>
    %c0_22 = arith.constant 0 : index
    %c0_23 = arith.constant 0 : index
    %72 = vector.load %arg7[%c0_22, %c0_23] : memref<1x128xf32, #tpu.memory_space<vmem>>, vector<1x128xf32>
    %cst_24 = arith.constant dense<0.000000e+00> : vector<16xf32>
    %73 = vector.multi_reduction <add>, %71, %cst_24 [1] : vector<16x128xf32> to vector<16xf32>
    %74 = vector.shape_cast %73 : vector<16xf32> to vector<16x1xf32>
    %cst_25 = arith.constant 1.280000e+02 : f32
    %75 = vector.broadcast %cst_25 : f32 to vector<16x1xf32>
    %76 = arith.divf %74, %75 : vector<16x1xf32>
    %77 = vector.broadcast %76 : vector<16x1xf32> to vector<16x128xf32>
    %78 = arith.subf %71, %77 : vector<16x128xf32>
    %79 = arith.mulf %78, %78 : vector<16x128xf32>
    %cst_26 = arith.constant dense<0.000000e+00> : vector<16xf32>
    %80 = vector.multi_reduction <add>, %79, %cst_26 [1] : vector<16x128xf32> to vector<16xf32>
    %81 = vector.shape_cast %80 : vector<16xf32> to vector<16x1xf32>
    %cst_27 = arith.constant 1.280000e+02 : f32
    %82 = vector.broadcast %cst_27 : f32 to vector<16x1xf32>
    %83 = arith.divf %81, %82 : vector<16x1xf32>
    %84 = vector.broadcast %76 : vector<16x1xf32> to vector<16x128xf32>
    %85 = arith.subf %71, %84 : vector<16x128xf32>
    %cst_28 = arith.constant 9.99999974E-6 : f32
    %86 = vector.broadcast %cst_28 : f32 to vector<16x1xf32>
    %87 = arith.addf %83, %86 : vector<16x1xf32>
    %88 = math.rsqrt %87 : vector<16x1xf32>
    %89 = vector.broadcast %88 : vector<16x1xf32> to vector<16x128xf32>
    %90 = arith.mulf %85, %89 : vector<16x128xf32>
    %91 = vector.broadcast %72 : vector<1x128xf32> to vector<16x128xf32>
    %92 = arith.mulf %90, %91 : vector<16x128xf32>
    %93 = arith.truncf %92 : vector<16x128xf32> to vector<16x128xbf16>
    %c0_29 = arith.constant 0 : index
    %c0_30 = arith.constant 0 : index
    %94 = vector.load %arg8[%c0_29, %c0_30] : memref<128x512xbf16, #tpu.memory_space<vmem>>, vector<128x512xbf16>
    %cst_31 = arith.constant dense<0.000000e+00> : vector<16x512xf32>
    %95 = tpu.matmul %93, %94, %cst_31 {dimension_numbers = #tpu.dot_dimension_numbers<[1], [0], [0], [1], [0, 0, 1, 1], [], []>} : vector<16x128xbf16>, vector<128x512xbf16>, vector<16x512xf32> -> vector<16x512xf32>
    %cst_32 = arith.constant 5.000000e-01 : f32
    %96 = vector.broadcast %cst_32 : f32 to vector<16x512xf32>
    %97 = arith.mulf %96, %95 : vector<16x512xf32>
    %cst_33 = arith.constant 0.707106769 : f32
    %98 = vector.broadcast %cst_33 : f32 to vector<16x512xf32>
    %99 = arith.mulf %95, %98 : vector<16x512xf32>
    %100 = math.absf %99 : vector<16x512xf32>
    %cst_34 = arith.constant 0.327591091 : f32
    %101 = vector.broadcast %cst_34 : f32 to vector<16x512xf32>
    %102 = arith.mulf %101, %100 : vector<16x512xf32>
    %cst_35 = arith.constant 1.000000e+00 : f32
    %103 = vector.broadcast %cst_35 : f32 to vector<16x512xf32>
    %104 = arith.addf %103, %102 : vector<16x512xf32>
    %cst_36 = arith.constant 1.000000e+00 : f32
    %105 = vector.broadcast %cst_36 : f32 to vector<16x512xf32>
    %106 = arith.divf %105, %104 : vector<16x512xf32>
    %cst_37 = arith.constant 1.06140542 : f32
    %107 = vector.broadcast %cst_37 : f32 to vector<16x512xf32>
    %108 = arith.mulf %107, %106 : vector<16x512xf32>
    %cst_38 = arith.constant -1.45315206 : f32
    %109 = vector.broadcast %cst_38 : f32 to vector<16x512xf32>
    %110 = arith.addf %108, %109 : vector<16x512xf32>
    %111 = arith.mulf %110, %106 : vector<16x512xf32>
    %cst_39 = arith.constant 1.42141378 : f32
    %112 = vector.broadcast %cst_39 : f32 to vector<16x512xf32>
    %113 = arith.addf %111, %112 : vector<16x512xf32>
    %114 = arith.mulf %113, %106 : vector<16x512xf32>
    %cst_40 = arith.constant -0.284496725 : f32
    %115 = vector.broadcast %cst_40 : f32 to vector<16x512xf32>
    %116 = arith.addf %114, %115 : vector<16x512xf32>
    %117 = arith.mulf %116, %106 : vector<16x512xf32>
    %cst_41 = arith.constant 0.254829586 : f32
    %118 = vector.broadcast %cst_41 : f32 to vector<16x512xf32>
    %119 = arith.addf %117, %118 : vector<16x512xf32>
    %120 = arith.mulf %119, %106 : vector<16x512xf32>
    %cst_42 = arith.constant 0.000000e+00 : f32
    %121 = vector.broadcast %cst_42 : f32 to vector<16x512xf32>
    %122 = arith.subf %121, %100 : vector<16x512xf32>
    %123 = arith.mulf %122, %100 : vector<16x512xf32>
    %124 = math.exp %123 : vector<16x512xf32>
    %125 = arith.mulf %120, %124 : vector<16x512xf32>
    %cst_43 = arith.constant 1.000000e+00 : f32
    %126 = vector.broadcast %cst_43 : f32 to vector<16x512xf32>
    %127 = arith.subf %126, %125 : vector<16x512xf32>
    %cst_44 = arith.constant 0.000000e+00 : f32
    %128 = vector.broadcast %cst_44 : f32 to vector<16x512xf32>
    %129 = arith.cmpf olt, %99, %128 : vector<16x512xf32>
    %cst_45 = arith.constant 0.000000e+00 : f32
    %130 = vector.broadcast %cst_45 : f32 to vector<16x512xf32>
    %131 = arith.subf %130, %127 : vector<16x512xf32>
    %132 = arith.select %129, %131, %127 : vector<16x512xi1>, vector<16x512xf32>
    %cst_46 = arith.constant 1.000000e+00 : f32
    %133 = vector.broadcast %cst_46 : f32 to vector<16x512xf32>
    %134 = arith.addf %133, %132 : vector<16x512xf32>
    %135 = arith.mulf %97, %134 : vector<16x512xf32>
    %136 = arith.truncf %135 : vector<16x512xf32> to vector<16x512xbf16>
    %c0_47 = arith.constant 0 : index
    %c0_48 = arith.constant 0 : index
    %137 = vector.load %arg9[%c0_47, %c0_48] : memref<512x128xbf16, #tpu.memory_space<vmem>>, vector<512x128xbf16>
    %cst_49 = arith.constant dense<0.000000e+00> : vector<16x128xf32>
    %138 = tpu.matmul %136, %137, %cst_49 {dimension_numbers = #tpu.dot_dimension_numbers<[1], [0], [0], [1], [0, 0, 1, 1], [], []>} : vector<16x512xbf16>, vector<512x128xbf16>, vector<16x128xf32> -> vector<16x128xf32>
    %139 = arith.addf %71, %138 : vector<16x128xf32>
    %c0_50 = arith.constant 0 : index
    %c0_51 = arith.constant 0 : index
    %c0_52 = arith.constant 0 : index
    %140 = vector.load %arg10[%c0_50, %c0_51, %c0_52] : memref<1x16x128xf32, #tpu.memory_space<vmem>>, vector<1x16x128xf32>
    %141 = vector.shape_cast %140 : vector<1x16x128xf32> to vector<16x128xf32>
    %142 = vector.shape_cast %139 : vector<16x128xf32> to vector<1x16x128xf32>
    tpu.vector_store %arg10[%c0_50, %c0_51, %c0_52], %142 {strides = array<i32>} : memref<1x16x128xf32, #tpu.memory_space<vmem>>, vector<1x16x128xf32>,
    return
  }
  func.func @transform_0(%arg0: i32) -> (i32, i32, i32) {
    %c0_i32 = arith.constant 0 : i32
    %c0_i32_0 = arith.constant 0 : i32
    %c0_i32_1 = arith.constant 0 : i32
    return %arg0, %c0_i32, %c0_i32_0 : i32, i32, i32
  }
  func.func @transform_1(%arg0: i32) -> (i32, i32) {
    %c0_i32 = arith.constant 0 : i32
    %c0_i32_0 = arith.constant 0 : i32
    %c0_i32_1 = arith.constant 0 : i32
    return %c0_i32, %c0_i32_0 : i32, i32
  }
  func.func @transform_2(%arg0: i32) -> (i32, i32) {
    %c0_i32 = arith.constant 0 : i32
    %c0_i32_0 = arith.constant 0 : i32
    %c0_i32_1 = arith.constant 0 : i32
    return %c0_i32, %c0_i32_0 : i32, i32
  }
  func.func @transform_3(%arg0: i32) -> (i32, i32) {
    %c0_i32 = arith.constant 0 : i32
    %c0_i32_0 = arith.constant 0 : i32
    %c0_i32_1 = arith.constant 0 : i32
    return %c0_i32, %c0_i32_0 : i32, i32
  }
  func.func @transform_4(%arg0: i32) -> (i32, i32) {
    %c0_i32 = arith.constant 0 : i32
    %c0_i32_0 = arith.constant 0 : i32
    %c0_i32_1 = arith.constant 0 : i32
    return %c0_i32, %c0_i32_0 : i32, i32
  }
  func.func @transform_5(%arg0: i32) -> (i32, i32) {
    %c0_i32 = arith.constant 0 : i32
    %c0_i32_0 = arith.constant 0 : i32
    %c0_i32_1 = arith.constant 0 : i32
    return %c0_i32, %c0_i32_0 : i32, i32
  }
  func.func @transform_6(%arg0: i32) -> (i32, i32) {
    %c0_i32 = arith.constant 0 : i32
    %c0_i32_0 = arith.constant 0 : i32
    %c0_i32_1 = arith.constant 0 : i32
    return %c0_i32, %c0_i32_0 : i32, i32
  }
  func.func @transform_7(%arg0: i32) -> (i32, i32) {
    %c0_i32 = arith.constant 0 : i32
    %c0_i32_0 = arith.constant 0 : i32
    %c0_i32_1 = arith.constant 0 : i32
    return %c0_i32, %c0_i32_0 : i32, i32
  }
  func.func @transform_8(%arg0: i32) -> (i32, i32) {
    %c0_i32 = arith.constant 0 : i32
    %c0_i32_0 = arith.constant 0 : i32
    %c0_i32_1 = arith.constant 0 : i32
    return %c0_i32, %c0_i32_0 : i32, i32
  }
  func.func @transform_9(%arg0: i32) -> (i32, i32, i32) {
    %c0_i32 = arith.constant 0 : i32
    %c0_i32_0 = arith.constant 0 : i32
    %c0_i32_1 = arith.constant 0 : i32
    return %arg0, %c0_i32, %c0_i32_0 : i32, i32, i32
  }
}

</mosaic_0001>

<llo_original>
// kernel: block_forward.1
$region0: #{block_forward.1}
  #allocation0 [shape = 'u32[]', space=smem, size = 0x4, offset = 0x4, fixed_abs, tag = 'smem constant byte address 0x4 - core index']
  #allocation1 [shape = 'u32[144,128]{1,0:T(1,128)}', space=vmem, size = 0x12000, scoped, tag = 'internal scratch']
  %s0 = inlined_call_operand.hbm [shape: f32[2,16,128], index: 0, kind: input, shape index: {}]
  %s1 = inlined_call_operand.vmem [shape: f32[1,128], index: 1, kind: input, shape index: {}]
  %s2 = inlined_call_operand.hbm [shape: bf16[128,384], index: 2, kind: input, shape index: {}]
  %s3 = inlined_call_operand.hbm [shape: f32[128,128], index: 3, kind: input, shape index: {}]
  %s4 = inlined_call_operand.hbm [shape: f32[128,128], index: 4, kind: input, shape index: {}]
  %s5 = inlined_call_operand.hbm [shape: bf16[128,128], index: 5, kind: input, shape index: {}]
  %s6 = inlined_call_operand.vmem [shape: f32[1,128], index: 6, kind: input, shape index: {}]
  %s7 = inlined_call_operand.hbm [shape: bf16[128,512], index: 7, kind: input, shape index: {}]
  %s8 = inlined_call_operand.hbm [shape: bf16[512,128], index: 8, kind: input, shape index: {}]
  %s9 = inlined_call_operand.hbm [shape: f32[2,16,128], index: 9, kind: output, shape index: {}]
  %s10 = sld [smem:[#allocation0]]
  $region97: #{block_forward.1} parent=0
    _
  %s12 = ssub.s32 1, %s10
  %s13 = scalar_select 0, %s12, %s10
  $region1: #{block_forward.1} parent=0
    #allocation2 [shape = 'u8[16384]{0}', space=vmem, size = 0x4000, scoped, tag = 'input window, operand 0']
    #allocation3 [shape = 's32[2]{0}', space=sflag, size = 0x8, scoped, tag = 'scoped memory for block_forward.1']
    #allocation4 [shape = 's32[2]{0}', space=sflag, size = 0x8, scoped, tag = 'scoped memory for block_forward.1']
    #allocation5 [shape = 'u8[98304]{0}', space=vmem, size = 0x18000, scoped, tag = 'input window, operand 2, single buffered']
    #allocation6 [shape = 's32[1]{0}', space=sflag, size = 0x4, scoped, tag = 'scoped memory for block_forward.1']
    #allocation7 [shape = 'u8[65536]{0}', space=vmem, size = 0x10000, scoped, tag = 'input window, operand 3, single buffered']
    #allocation8 [shape = 'u8[65536]{0}', space=vmem, size = 0x10000, scoped, tag = 'input window, operand 4, single buffered']
    #allocation9 [shape = 's32[1]{0}', space=sflag, size = 0x4, scoped, tag = 'scoped memory for block_forward.1']
    #allocation10 [shape = 'u8[32768]{0}', space=vmem, size = 0x8000, scoped, tag = 'input window, operand 5, single buffered']
    #allocation11 [shape = 'u8[131072]{0}', space=vmem, size = 0x20000, scoped, tag = 'input window, operand 7, single buffered']
    #allocation12 [shape = 's32[1]{0}', space=sflag, size = 0x4, scoped, tag = 'scoped memory for block_forward.1']
    #allocation13 [shape = 'u8[131072]{0}', space=vmem, size = 0x20000, scoped, tag = 'input window, operand 8, single buffered']
    #allocation14 [shape = 'u8[16384]{0}', space=vmem, size = 0x4000, scoped, tag = 'output window, operand 0']
    %14 = vsyncpa [#allocation3], 0
    %s15 = scalar_lea.sflag [#allocation3], 1
    %16 = vsyncpa %s15, 0
    %17 = vsyncpa [#allocation6], 0
    %18 = vsyncpa [#allocation9], 0
    %19 = vsyncpa [#allocation12], 0
    %20 = vsyncpa [#allocation4], 0
    %s21 = scalar_lea.sflag [#allocation4], 1
    %22 = vsyncpa %s21, 0
    loop: start=0, step=1, limit=4
    $region2: #{block_forward.1} parent=1 // loop_pre_header
      _
    $region3: #{block_forward.1} parent=1 // loop_header
      %s24 = sphi 0, %s28
      %p25 = scmp.ge.s32.totalorder %s24, 4
      %s34 = sphi 0, %s36
      %s37 = sphi 0, %s34
      %s38 = sphi 0, %s37
      %s54 = sphi 0, %s38
      %s58 = sphi 0, %s58
      %s60 = sphi 0, %s58
      %s61 = sphi 0, %s60
      %s75 = sphi 0, %s61
      %s79 = sphi 0, %s79
      %s81 = sphi 0, %s79
      %s82 = sphi 0, %s81
      %s96 = sphi 0, %s82
      %s100 = sphi 0, %s100
      %s102 = sphi 0, %s100
      %s103 = sphi 0, %s102
      %s117 = sphi 0, %s103
      %s121 = sphi 0, %s121
      %s123 = sphi 0, %s121
      %s124 = sphi 0, %s123
      %s138 = sphi 0, %s124
      %s142 = sphi 0, %s142
      %s144 = sphi 0, %s142
      %s145 = sphi 0, %s144
      %s159 = sphi 0, %s145
      %s163 = sphi 0, %s163
      %s165 = sphi 0, %s163
      %s166 = sphi 0, %s165
      %s180 = sphi 0, %s166
      %s184 = sphi 0, %s184
      %s186 = sphi 0, %s184
      %s187 = sphi 0, %s186
      %s201 = sphi 0, %s187
      %s205 = sphi 0, %s205
      %s207 = sphi 0, %s205
      %s208 = sphi 0, %s207
      %s222 = sphi 0, %s208
      %s228 = sphi 0, %s230
      %s231 = sphi 0, %s228
      %s232 = sphi 0, %s231
      %s248 = sphi 0, %s232
    $region4: #{block_forward.1} parent=1 // loop_header_branch
      %27 = sbr.rel (%p25) target = $region8
    $region5: #{block_forward.1} parent=1 // loop_body
      %s29 = ssub.s32 %s24, 1
      %s30 = ssub.s32 %s24, 2
      %s31 = sadd.s32 %s24, 1
      %s32 = ssub.s32 %s24, %s31
      %p33 = scmp.eq.s32.totalorder %s32, 0
      %s35 = sadd.s32 %s34, 1
      %s36 = scalar_select %p33, %s34, %s35
      %p39 = pneg %p33
      %p40 = scmp.eq.s32.totalorder %s24, 1
      %p41 = por %p39, %p40
      %p42 = scmp.ne.s32.totalorder %s34, %s37
      %p43 = scmp.eq.s32.totalorder %s24, 0
      %p44 = por %p42, %p43
      %p45 = scmp.ne.s32.totalorder %s34, %s37
      %p46 = scmp.eq.s32.totalorder %s29, 1
      %p47 = por %p45, %p46
      %p48 = scmp.ne.s32.totalorder %s37, %s38
      %p49 = scmp.eq.s32.totalorder %s29, 0
      %p50 = por %p48, %p49
      %p51 = scmp.ne.s32.totalorder %s37, %s38
      %p52 = scmp.eq.s32.totalorder %s30, 1
      %p53 = por %p51, %p52
      %p55 = scmp.ne.s32.totalorder %s38, %s54
      %p56 = scmp.eq.s32.totalorder %s30, 0
      %p57 = por %p55, %p56
      %s59 = sadd.s32 %s58, 1
      %p62 = scmp.eq.s32.totalorder %s24, 1
      %p63 = scmp.ne.s32.totalorder %s58, %s60
      %p64 = scmp.eq.s32.totalorder %s24, 0
      %p65 = por %p63, %p64
      %p66 = scmp.ne.s32.totalorder %s58, %s60
      %p67 = scmp.eq.s32.totalorder %s29, 1
      %p68 = por %p66, %p67
      %p69 = scmp.ne.s32.totalorder %s60, %s61
      %p70 = scmp.eq.s32.totalorder %s29, 0
      %p71 = por %p69, %p70
      %p72 = scmp.ne.s32.totalorder %s60, %s61
      %p73 = scmp.eq.s32.totalorder %s30, 1
      %p74 = por %p72, %p73
      %p76 = scmp.ne.s32.totalorder %s61, %s75
      %p77 = scmp.eq.s32.totalorder %s30, 0
      %p78 = por %p76, %p77
      %s80 = sadd.s32 %s79, 1
      %p83 = scmp.eq.s32.totalorder %s24, 1
      %p84 = scmp.ne.s32.totalorder %s79, %s81
      %p85 = scmp.eq.s32.totalorder %s24, 0
      %p86 = por %p84, %p85
      %p87 = scmp.ne.s32.totalorder %s79, %s81
      %p88 = scmp.eq.s32.totalorder %s29, 1
      %p89 = por %p87, %p88
      %p90 = scmp.ne.s32.totalorder %s81, %s82
      %p91 = scmp.eq.s32.totalorder %s29, 0
      %p92 = por %p90, %p91
      %p93 = scmp.ne.s32.totalorder %s81, %s82
      %p94 = scmp.eq.s32.totalorder %s30, 1
      %p95 = por %p93, %p94
      %p97 = scmp.ne.s32.totalorder %s82, %s96
      %p98 = scmp.eq.s32.totalorder %s30, 0
      %p99 = por %p97, %p98
      %s101 = sadd.s32 %s100, 1
      %p104 = scmp.eq.s32.totalorder %s24, 1
      %p105 = scmp.ne.s32.totalorder %s100, %s102
      %p106 = scmp.eq.s32.totalorder %s24, 0
      %p107 = por %p105, %p106
      %p108 = scmp.ne.s32.totalorder %s100, %s102
      %p109 = scmp.eq.s32.totalorder %s29, 1
      %p110 = por %p108, %p109
      %p111 = scmp.ne.s32.totalorder %s102, %s103
      %p112 = scmp.eq.s32.totalorder %s29, 0
      %p113 = por %p111, %p112
      %p114 = scmp.ne.s32.totalorder %s102, %s103
      %p115 = scmp.eq.s32.totalorder %s30, 1
      %p116 = por %p114, %p115
      %p118 = scmp.ne.s32.totalorder %s103, %s117
      %p119 = scmp.eq.s32.totalorder %s30, 0
      %p120 = por %p118, %p119
      %s122 = sadd.s32 %s121, 1
      %p125 = scmp.eq.s32.totalorder %s24, 1
      %p126 = scmp.ne.s32.totalorder %s121, %s123
      %p127 = scmp.eq.s32.totalorder %s24, 0
      %p128 = por %p126, %p127
      %p129 = scmp.ne.s32.totalorder %s121, %s123
      %p130 = scmp.eq.s32.totalorder %s29, 1
      %p131 = por %p129, %p130
      %p132 = scmp.ne.s32.totalorder %s123, %s124
      %p133 = scmp.eq.s32.totalorder %s29, 0
      %p134 = por %p132, %p133
      %p135 = scmp.ne.s32.totalorder %s123, %s124
      %p136 = scmp.eq.s32.totalorder %s30, 1
      %p137 = por %p135, %p136
      %p139 = scmp.ne.s32.totalorder %s124, %s138
      %p140 = scmp.eq.s32.totalorder %s30, 0
      %p141 = por %p139, %p140
      %s143 = sadd.s32 %s142, 1
      %p146 = scmp.eq.s32.totalorder %s24, 1
      %p147 = scmp.ne.s32.totalorder %s142, %s144
      %p148 = scmp.eq.s32.totalorder %s24, 0
      %p149 = por %p147, %p148
      %p150 = scmp.ne.s32.totalorder %s142, %s144
      %p151 = scmp.eq.s32.totalorder %s29, 1
      %p152 = por %p150, %p151
      %p153 = scmp.ne.s32.totalorder %s144, %s145
      %p154 = scmp.eq.s32.totalorder %s29, 0
      %p155 = por %p153, %p154
      %p156 = scmp.ne.s32.totalorder %s144, %s145
      %p157 = scmp.eq.s32.totalorder %s30, 1
      %p158 = por %p156, %p157
      %p160 = scmp.ne.s32.totalorder %s145, %s159
      %p161 = scmp.eq.s32.totalorder %s30, 0
      %p162 = por %p160, %p161
      %s164 = sadd.s32 %s163, 1
      %p167 = scmp.eq.s32.totalorder %s24, 1
      %p168 = scmp.ne.s32.totalorder %s163, %s165
      %p169 = scmp.eq.s32.totalorder %s24, 0
      %p170 = por %p168, %p169
      %p171 = scmp.ne.s32.totalorder %s163, %s165
      %p172 = scmp.eq.s32.totalorder %s29, 1
      %p173 = por %p171, %p172
      %p174 = scmp.ne.s32.totalorder %s165, %s166
      %p175 = scmp.eq.s32.totalorder %s29, 0
      %p176 = por %p174, %p175
      %p177 = scmp.ne.s32.totalorder %s165, %s166
      %p178 = scmp.eq.s32.totalorder %s30, 1
      %p179 = por %p177, %p178
      %p181 = scmp.ne.s32.totalorder %s166, %s180
      %p182 = scmp.eq.s32.totalorder %s30, 0
      %p183 = por %p181, %p182
      %s185 = sadd.s32 %s184, 1
      %p188 = scmp.eq.s32.totalorder %s24, 1
      %p189 = scmp.ne.s32.totalorder %s184, %s186
      %p190 = scmp.eq.s32.totalorder %s24, 0
      %p191 = por %p189, %p190
      %p192 = scmp.ne.s32.totalorder %s184, %s186
      %p193 = scmp.eq.s32.totalorder %s29, 1
      %p194 = por %p192, %p193
      %p195 = scmp.ne.s32.totalorder %s186, %s187
      %p196 = scmp.eq.s32.totalorder %s29, 0
      %p197 = por %p195, %p196
      %p198 = scmp.ne.s32.totalorder %s186, %s187
      %p199 = scmp.eq.s32.totalorder %s30, 1
      %p200 = por %p198, %p199
      %p202 = scmp.ne.s32.totalorder %s187, %s201
      %p203 = scmp.eq.s32.totalorder %s30, 0
      %p204 = por %p202, %p203
      %s206 = sadd.s32 %s205, 1
      %p209 = scmp.eq.s32.totalorder %s24, 1
      %p210 = scmp.ne.s32.totalorder %s205, %s207
      %p211 = scmp.eq.s32.totalorder %s24, 0
      %p212 = por %p210, %p211
      %p213 = scmp.ne.s32.totalorder %s205, %s207
      %p214 = scmp.eq.s32.totalorder %s29, 1
      %p215 = por %p213, %p214
      %p216 = scmp.ne.s32.totalorder %s207, %s208
      %p217 = scmp.eq.s32.totalorder %s29, 0
      %p218 = por %p216, %p217
      %p219 = scmp.ne.s32.totalorder %s207, %s208
      %p220 = scmp.eq.s32.totalorder %s30, 1
      %p221 = por %p219, %p220
      %p223 = scmp.ne.s32.totalorder %s208, %s222
      %p224 = scmp.eq.s32.totalorder %s30, 0
      %p225 = por %p223, %p224
      %s226 = ssub.s32 %s24, %s31
      %p227 = scmp.eq.s32.totalorder %s226, 0
      %s229 = sadd.s32 %s228, 1
      %s230 = scalar_select %p227, %s228, %s229
      %p233 = pneg %p227
      %p234 = scmp.eq.s32.totalorder %s24, 1
      %p235 = por %p233, %p234
      %p236 = scmp.ne.s32.totalorder %s228, %s231
      %p237 = scmp.eq.s32.totalorder %s24, 0
      %p238 = por %p236, %p237
      %p239 = scmp.ne.s32.totalorder %s228, %s231
      %p240 = scmp.eq.s32.totalorder %s29, 1
      %p241 = por %p239, %p240
      %p242 = scmp.ne.s32.totalorder %s231, %s232
      %p243 = scmp.eq.s32.totalorder %s29, 0
      %p244 = por %p242, %p243
      %p245 = scmp.ne.s32.totalorder %s231, %s232
      %p246 = scmp.eq.s32.totalorder %s30, 1
      %p247 = por %p245, %p246
      %p249 = scmp.ne.s32.totalorder %s232, %s248
      %p250 = scmp.eq.s32.totalorder %s30, 0
      %p251 = por %p249, %p250
      %p252 = scmp.le.s32.totalorder 1, %s24
      %p253 = scmp.lt.s32.totalorder %s24, 3
      %p254 = pnand %p252, %p253
      %p255 = pneg %p254
      // Predicated region
      $region9: #{block_forward.1} parent=5 // pred_check
        _
      $region10: #{block_forward.1} parent=5 // pred_check_branch
        %257 = sbr.rel (%p254) target = $region12
      $region11: #{block_forward.1} parent=5 // pred_region
        %s258 = ssub.s32 %s24, 1
        // Predicated region
        $region13: #{block_forward.1} parent=11 // pred_check
          %p259 = pneg %p71
        $region14: #{block_forward.1} parent=11 // pred_check_branch
          %261 = sbr.rel (%p259) target = $region16
        $region15: #{block_forward.1} parent=11 // pred_region
          _
        $region16: #{block_forward.1} parent=11 // pred_fallthru
          _
        // Predicated region
        $region17: #{block_forward.1} parent=11 // pred_check
          %p262 = pneg %p92
        $region18: #{block_forward.1} parent=11 // pred_check_branch
          %264 = sbr.rel (%p262) target = $region20
        $region19: #{block_forward.1} parent=11 // pred_region
          %s266 = ssub.s32 3072, 3072
          %267 = vsyncadd [#allocation6], %s266
          %s268 = sshll.u32 [#allocation5], 4
          %s269 = int_to_ptr.vmem [resolvable:$true] %s268
          %274 = dma.hbm_to_vmem [thread:$0]  %s2, 3072, %s269, [#allocation6], 192, 192, 12
        $region20: #{block_forward.1} parent=11 // pred_fallthru
          _
        // Predicated region
        $region21: #{block_forward.1} parent=11 // pred_check
          %p275 = pneg %p113
        $region22: #{block_forward.1} parent=11 // pred_check_branch
          %277 = sbr.rel (%p275) target = $region24
        $region23: #{block_forward.1} parent=11 // pred_region
          %s279 = ssub.s32 2048, 2048
          %280 = vsyncadd [#allocation6], %s279
          %s281 = sshll.u32 [#allocation7], 4
          %s282 = int_to_ptr.vmem [resolvable:$true] %s281
          %287 = dma.hbm_to_vmem [thread:$0]  %s3, 2048, %s282, [#allocation6], 128, 128, 8
        $region24: #{block_forward.1} parent=11 // pred_fallthru
          _
        // Predicated region
        $region25: #{block_forward.1} parent=11 // pred_check
          %p288 = pneg %p134
        $region26: #{block_forward.1} parent=11 // pred_check_branch
          %290 = sbr.rel (%p288) target = $region28
        $region27: #{block_forward.1} parent=11 // pred_region
          %s292 = ssub.s32 2048, 2048
          %293 = vsyncadd [#allocation9], %s292
          %s294 = sshll.u32 [#allocation8], 4
          %s295 = int_to_ptr.vmem [resolvable:$true] %s294
          %300 = dma.hbm_to_vmem [thread:$0]  %s4, 2048, %s295, [#allocation9], 128, 128, 8
        $region28: #{block_forward.1} parent=11 // pred_fallthru
          _
        // Predicated region
        $region29: #{block_forward.1} parent=11 // pred_check
          %p301 = pneg %p155
        $region30: #{block_forward.1} parent=11 // pred_check_branch
          %303 = sbr.rel (%p301) target = $region32
        $region31: #{block_forward.1} parent=11 // pred_region
          %s305 = ssub.s32 1024, 1024
          %306 = vsyncadd [#allocation9], %s305
          %s307 = sshll.u32 [#allocation10], 4
          %s308 = int_to_ptr.vmem [resolvable:$true] %s307
          %313 = dma.hbm_to_vmem [thread:$0]  %s5, 1024, %s308, [#allocation9], 64, 64, 4
        $region32: #{block_forward.1} parent=11 // pred_fallthru
          _
        // Predicated region
        $region33: #{block_forward.1} parent=11 // pred_check
          %p314 = pneg %p176
        $region34: #{block_forward.1} parent=11 // pred_check_branch
          %316 = sbr.rel (%p314) target = $region36
        $region35: #{block_forward.1} parent=11 // pred_region
          _
        $region36: #{block_forward.1} parent=11 // pred_fallthru
          _
        // Predicated region
        $region37: #{block_forward.1} parent=11 // pred_check
          %p317 = pneg %p197
        $region38: #{block_forward.1} parent=11 // pred_check_branch
          %319 = sbr.rel (%p317) target = $region40
        $region39: #{block_forward.1} parent=11 // pred_region
          %s321 = ssub.s32 4096, 4096
          %322 = vsyncadd [#allocation12], %s321
          %s323 = sshll.u32 [#allocation11], 4
          %s324 = int_to_ptr.vmem [resolvable:$true] %s323
          %329 = dma.hbm_to_vmem [thread:$0]  %s7, 4096, %s324, [#allocation12], 256, 256, 16
        $region40: #{block_forward.1} parent=11 // pred_fallthru
          _
        // Predicated region
        $region41: #{block_forward.1} parent=11 // pred_check
          %p330 = pneg %p218
        $region42: #{block_forward.1} parent=11 // pred_check_branch
          %332 = sbr.rel (%p330) target = $region44
        $region43: #{block_forward.1} parent=11 // pred_region
          %s334 = ssub.s32 4096, 4096
          %335 = vsyncadd [#allocation12], %s334
          %s336 = sshll.u32 [#allocation13], 4
          %s337 = int_to_ptr.vmem [resolvable:$true] %s336
          %342 = dma.hbm_to_vmem [thread:$0]  %s8, 4096, %s337, [#allocation12], 64, 64, 4
        $region44: #{block_forward.1} parent=11 // pred_fallthru
          _
      $region12: #{block_forward.1} parent=5 // pred_fallthru
        _
      %p343 = scmp.lt.s32.totalorder %s24, 2
      // Predicated region
      $region45: #{block_forward.1} parent=5 // pred_check
        %p344 = pneg %p343
      $region46: #{block_forward.1} parent=5 // pred_check_branch
        %346 = sbr.rel (%p344) target = $region48
      $region47: #{block_forward.1} parent=5 // pred_region
        // Predicated region
        $region49: #{block_forward.1} parent=47 // pred_check
          %p347 = pneg %p44
        $region50: #{block_forward.1} parent=47 // pred_check_branch
          %349 = sbr.rel (%p347) target = $region52
        $region51: #{block_forward.1} parent=47 // pred_region
          %s350 = sand.u32 %s34, 1
          %s351 = scalar_lea.sflag [#allocation3], %s350
          %s352 = sand.u32 %s34, 1
          %s353 = smul.addr %s352, 16
          %s354 = scalar_lea.vmem [#allocation2], %s353
          %s356 = ssub.s32 256, 256
          %357 = vsyncadd %s351, %s356
          %s358 = smul.addr %s24, 2
          %s359 = smul.addr %s358, 128
          %s360 = scalar_lea.hbm %s0, %s359
          %s361 = sshll.u32 %s354, 4
          %s362 = int_to_ptr.vmem [resolvable:$true] %s361
          %367 = dma.hbm_to_vmem [thread:$0]  %s360, 256, %s362, %s351, 128, 128, 8
        $region52: #{block_forward.1} parent=47 // pred_fallthru
          _
      $region48: #{block_forward.1} parent=5 // pred_fallthru
        _
      %p368 = scmp.le.s32.totalorder 1, %s24
      %p369 = scmp.lt.s32.totalorder %s24, 3
      %p370 = pnand %p368, %p369
      %p371 = pneg %p370
      // Predicated region
      $region53: #{block_forward.1} parent=5 // pred_check
        _
      $region54: #{block_forward.1} parent=5 // pred_check_branch
        %373 = sbr.rel (%p370) target = $region56
      $region55: #{block_forward.1} parent=5 // pred_region
        %s374 = ssub.s32 %s24, 1
        %s375 = sand.u32 %s37, 1
        %s376 = scalar_lea.sflag [#allocation3], %s375
        %s377 = sand.u32 %s37, 1
        %s378 = smul.addr %s377, 16
        %s379 = scalar_lea.vmem [#allocation2], %s378
        // Predicated region
        $region57: #{block_forward.1} parent=55 // pred_check
          %p380 = pneg %p50
        $region58: #{block_forward.1} parent=55 // pred_check_branch
          %382 = sbr.rel (%p380) target = $region60
        $region59: #{block_forward.1} parent=55 // pred_region
          %383 = dma.done %s376, 256
        $region60: #{block_forward.1} parent=55 // pred_fallthru
          _
        // Predicated region
        $region61: #{block_forward.1} parent=55 // pred_check
          %p384 = pneg %p92
        $region62: #{block_forward.1} parent=55 // pred_check_branch
          %386 = sbr.rel (%p384) target = $region64
        $region63: #{block_forward.1} parent=55 // pred_region
          %387 = dma.done [#allocation6], 3072
        $region64: #{block_forward.1} parent=55 // pred_fallthru
          _
        // Predicated region
        $region65: #{block_forward.1} parent=55 // pred_check
          %p388 = pneg %p113
        $region66: #{block_forward.1} parent=55 // pred_check_branch
          %390 = sbr.rel (%p388) target = $region68
        $region67: #{block_forward.1} parent=55 // pred_region
          %391 = dma.done [#allocation6], 2048
        $region68: #{block_forward.1} parent=55 // pred_fallthru
          _
        // Predicated region
        $region69: #{block_forward.1} parent=55 // pred_check
          %p392 = pneg %p134
        $region70: #{block_forward.1} parent=55 // pred_check_branch
          %394 = sbr.rel (%p392) target = $region72
        $region71: #{block_forward.1} parent=55 // pred_region
          %395 = dma.done [#allocation9], 2048
        $region72: #{block_forward.1} parent=55 // pred_fallthru
          _
        // Predicated region
        $region73: #{block_forward.1} parent=55 // pred_check
          %p396 = pneg %p155
        $region74: #{block_forward.1} parent=55 // pred_check_branch
          %398 = sbr.rel (%p396) target = $region76
        $region75: #{block_forward.1} parent=55 // pred_region
          %399 = dma.done [#allocation9], 1024
        $region76: #{block_forward.1} parent=55 // pred_fallthru
          _
        // Predicated region
        $region77: #{block_forward.1} parent=55 // pred_check
          %p400 = pneg %p197
        $region78: #{block_forward.1} parent=55 // pred_check_branch
          %402 = sbr.rel (%p400) target = $region80
        $region79: #{block_forward.1} parent=55 // pred_region
          %403 = dma.done [#allocation12], 4096
        $region80: #{block_forward.1} parent=55 // pred_fallthru
          _
        // Predicated region
        $region81: #{block_forward.1} parent=55 // pred_check
          %p404 = pneg %p218
        $region82: #{block_forward.1} parent=55 // pred_check_branch
          %406 = sbr.rel (%p404) target = $region84
        $region83: #{block_forward.1} parent=55 // pred_region
          %407 = dma.done [#allocation12], 4096
        $region84: #{block_forward.1} parent=55 // pred_fallthru
          _
        %s408 = sand.u32 %s37, 1
        %s409 = scalar_lea.sflag [#allocation3], %s408
        %s410 = sand.u32 %s37, 1
        %s411 = smul.addr %s410, 16
        %s412 = scalar_lea.vmem [#allocation2], %s411
        %p413 = pneg %p50
        %p414 = pneg %p47
        %p415 = pneg %p71
        %p416 = pneg %p68
        %p417 = pneg %p92
        %p418 = pneg %p89
        %p419 = pneg %p113
        %p420 = pneg %p110
        %p421 = pneg %p134
        %p422 = pneg %p131
        %p423 = pneg %p155
        %p424 = pneg %p152
        %p425 = pneg %p176
        %p426 = pneg %p173
        %p427 = pneg %p197
        %p428 = pneg %p194
        %p429 = pneg %p218
        %p430 = pneg %p215
        %p431 = pneg %p244
        %p432 = pneg %p241
        %s433 = sand.u32 %s231, 1
        %s434 = scalar_lea.sflag [#allocation4], %s433
        %s435 = sand.u32 %s231, 1
        %s436 = smul.addr %s435, 16
        %s437 = scalar_lea.vmem [#allocation14], %s436
        %v439 = vld [vmem:[%s379] sm:$0xff]
        %v440 = vld [vmem:[%s379 + $0x8] sm:$0xff]
        %v441 = vld [vmem:[%s1] sm:$0x1]
        %442 = vadd.xlane.f32.xlu0 %v439
        %v443 = vpop.xlane.xlu0 %442
        %444 = vadd.xlane.f32.xlu0 %v440
        %v445 = vpop.xlane.xlu0 %444
        %v446 = vrcp.pop 128.0
        %v447 = vmul.f32 %v443, %v446
        %v448 = vmul.f32 %v445, %v446
        %v449 = vsub.f32 %v439, %v447
        %v450 = vsub.f32 %v440, %v448
        %v451 = vmul.f32 %v449, %v449
        %v452 = vmul.f32 %v450, %v450
        %453 = vadd.xlane.f32.xlu0 %v451
        %v454 = vpop.xlane.xlu0 %453
        %455 = vadd.xlane.f32.xlu0 %v452
        %v456 = vpop.xlane.xlu0 %455
        %v457 = vmul.f32 %v454, %v446
        %v458 = vmul.f32 %v456, %v446
        %v459 = vadd.f32 %v457, 1e-05
        %v460 = vadd.f32 %v458, 1e-05
        %v461 = vrsqrt.pop %v459
        %v462 = vrsqrt.pop %v460
        %v463 = vmul.f32 %v449, %v461
        %v464 = vmul.f32 %v450, %v462
        %v466 = vlaneseq
        %v467 = vshrl.u32 %v466, 7
        %v468 = vsub.s32 0, %v467
        %v469 = vrot.slane %v441, %v468
        %v471 = vmul.f32 %v463, %v469
        %v472 = vmul.f32 %v464, %v469
        %v473 = vpack.c.bf16 %v472, %v471
        %v474 = vld [vmem:[#allocation5] sm:$0xff]
        %v475 = vld [vmem:[#allocation5 + $0x8] sm:$0xf]
        %v476 = vld [vmem:[#allocation5 + $0xc] sm:$0xff]
        %v477 = vld [vmem:[#allocation5 + $0x14] sm:$0xf]
        %v478 = vld [vmem:[#allocation5 + $0x18] sm:$0xff]
        %v479 = vld [vmem:[#allocation5 + $0x20] sm:$0xf]
        %v480 = vld [vmem:[#allocation5 + $0x24] sm:$0xff]
        %v481 = vld [vmem:[#allocation5 + $0x2c] sm:$0xf]
        %v482 = vld [vmem:[#allocation5 + $0x30] sm:$0xff]
        %v483 = vld [vmem:[#allocation5 + $0x38] sm:$0xf]
        %v484 = vld [vmem:[#allocation5 + $0x3c] sm:$0xff]
        %v485 = vld [vmem:[#allocation5 + $0x44] sm:$0xf]
        %v486 = vld [vmem:[#allocation5 + $0x48] sm:$0xff]
        %v487 = vld [vmem:[#allocation5 + $0x50] sm:$0xf]
        %v488 = vld [vmem:[#allocation5 + $0x54] sm:$0xff]
        %v489 = vld [vmem:[#allocation5 + $0x5c] sm:$0xf]
        %v490 = vld [vmem:[#allocation5 + $0x60] sm:$0xff]
        %v491 = vld [vmem:[#allocation5 + $0x68] sm:$0xf]
        %v492 = vld [vmem:[#allocation5 + $0x6c] sm:$0xff]
        %v493 = vld [vmem:[#allocation5 + $0x74] sm:$0xf]
        %v494 = vld [vmem:[#allocation5 + $0x78] sm:$0xff]
        %v495 = vld [vmem:[#allocation5 + $0x80] sm:$0xf]
        %v496 = vld [vmem:[#allocation5 + $0x84] sm:$0xff]
        %v497 = vld [vmem:[#allocation5 + $0x8c] sm:$0xf]
        %v498 = vld [vmem:[#allocation5 + $0x90] sm:$0xff]
        %v499 = vld [vmem:[#allocation5 + $0x98] sm:$0xf]
        %v500 = vld [vmem:[#allocation5 + $0x9c] sm:$0xff]
        %v501 = vld [vmem:[#allocation5 + $0xa4] sm:$0xf]
        %v502 = vld [vmem:[#allocation5 + $0xa8] sm:$0xff]
        %v503 = vld [vmem:[#allocation5 + $0xb0] sm:$0xf]
        %v504 = vld [vmem:[#allocation5 + $0xb4] sm:$0xff]
        %v505 = vld [vmem:[#allocation5 + $0xbc] sm:$0xf]
        %v538 = vunpack.c.l.b16 %v474
        %v539 = vunpack.c.h.b16 %v474
        %v540 = vunpack.c.l.b16 %v475
        %v541 = vunpack.c.l.b16 %v476
        %v542 = vunpack.c.h.b16 %v476
        %v543 = vunpack.c.l.b16 %v477
        %v544 = vunpack.c.l.b16 %v478
        %v545 = vunpack.c.h.b16 %v478
        %v546 = vunpack.c.l.b16 %v479
        %v547 = vunpack.c.l.b16 %v480
        %v548 = vunpack.c.h.b16 %v480
        %v549 = vunpack.c.l.b16 %v481
        %v550 = vunpack.c.l.b16 %v482
        %v551 = vunpack.c.h.b16 %v482
        %v552 = vunpack.c.l.b16 %v483
        %v553 = vunpack.c.l.b16 %v484
        %v554 = vunpack.c.h.b16 %v484
        %v555 = vunpack.c.l.b16 %v485
        %v556 = vunpack.c.l.b16 %v486
        %v557 = vunpack.c.h.b16 %v486
        %v558 = vunpack.c.l.b16 %v487
        %v559 = vunpack.c.l.b16 %v488
        %v560 = vunpack.c.h.b16 %v488
        %v561 = vunpack.c.l.b16 %v489
        %v562 = vunpack.c.l.b16 %v490
        %v563 = vunpack.c.h.b16 %v490
        %v564 = vunpack.c.l.b16 %v491
        %v565 = vunpack.c.l.b16 %v492
        %v566 = vunpack.c.h.b16 %v492
        %v567 = vunpack.c.l.b16 %v493
        %v568 = vunpack.c.l.b16 %v494
        %v569 = vunpack.c.h.b16 %v494
        %v570 = vunpack.c.l.b16 %v495
        %v571 = vunpack.c.l.b16 %v496
        %v572 = vunpack.c.h.b16 %v496
        %v573 = vunpack.c.l.b16 %v497
        %v574 = vunpack.c.l.b16 %v498
        %v575 = vunpack.c.h.b16 %v498
        %v576 = vunpack.c.l.b16 %v499
        %v577 = vunpack.c.l.b16 %v500
        %v578 = vunpack.c.h.b16 %v500
        %v579 = vunpack.c.l.b16 %v501
        %v580 = vunpack.c.l.b16 %v502
        %v581 = vunpack.c.h.b16 %v502
        %v582 = vunpack.c.l.b16 %v503
        %v583 = vunpack.c.l.b16 %v504
        %v584 = vunpack.c.h.b16 %v504
        %v585 = vunpack.c.l.b16 %v505
        %v586 = vpack.c.b16 %v541, %v538
        %v587 = vpack.c.b16 %v542, %v539
        %v588 = vpack.c.b16 %v543, %v540
        %v589 = vpack.c.b16 %v547, %v544
        %v590 = vpack.c.b16 %v548, %v545
        %v591 = vpack.c.b16 %v549, %v546
        %v592 = vpack.c.b16 %v553, %v550
        %v593 = vpack.c.b16 %v554, %v551
        %v594 = vpack.c.b16 %v555, %v552
        %v595 = vpack.c.b16 %v559, %v556
        %v596 = vpack.c.b16 %v560, %v557
        %v597 = vpack.c.b16 %v561, %v558
        %v598 = vpack.c.b16 %v565, %v562
        %v599 = vpack.c.b16 %v566, %v563
        %v600 = vpack.c.b16 %v567, %v564
        %v601 = vpack.c.b16 %v571, %v568
        %v602 = vpack.c.b16 %v572, %v569
        %v603 = vpack.c.b16 %v573, %v570
        %v604 = vpack.c.b16 %v577, %v574
        %v605 = vpack.c.b16 %v578, %v575
        %v606 = vpack.c.b16 %v579, %v576
        %v607 = vpack.c.b16 %v583, %v580
        %v608 = vpack.c.b16 %v584, %v581
        %v609 = vpack.c.b16 %v585, %v582
        %634 = vmatprep.subr.bf16.mxu0 %v608
        %635 = vmatpush1.bf16.msra.mxu0 %v607
        %636 = vmatprep.subr.bf16.mxu0 %v605
        %637 = vmatpush1.bf16.msra.mxu0 %v604
        %638 = vmatprep.subr.bf16.mxu0 %v602
        %639 = vmatpush1.bf16.msra.mxu0 %v601
        %640 = vmatprep.subr.bf16.mxu0 %v599
        %641 = vmatpush1.bf16.msra.mxu0 %v598
        %642 = vmatprep.subr.bf16.mxu0 %v596
        %643 = vmatpush1.bf16.msra.mxu0 %v595
        %644 = vmatprep.subr.bf16.mxu0 %v593
        %645 = vmatpush1.bf16.msra.mxu0 %v592
        %646 = vmatprep.subr.bf16.mxu0 %v590
        %647 = vmatpush1.bf16.msra.mxu0 %v589
        %648 = vmatprep.subr.bf16.mxu0 %v587
        %649 = vmatpush1.bf16.msra.mxu0 %v586
        %650 = vmatprep.subr.bf16.mxu0 0
        %651 = vmatpush2.bf16.msra.mxu0 0
        %652 = vmatprep.subr.bf16.mxu0 0
        %653 = vmatpush2.bf16.msra.mxu0 0
        %654 = vmatprep.subr.bf16.mxu0 0
        %655 = vmatpush2.bf16.msra.mxu0 0
        %656 = vmatprep.subr.bf16.mxu0 0
        %657 = vmatpush2.bf16.msra.mxu0 0
        %658 = vmatprep.subr.bf16.mxu0 0
        %659 = vmatpush2.bf16.msra.mxu0 0
        %660 = vmatprep.subr.bf16.mxu0 0
        %661 = vmatpush2.bf16.msra.mxu0 0
        %662 = vmatprep.subr.bf16.mxu0 0
        %663 = vmatpush2.bf16.msra.mxu0 0
        %664 = vmatprep.subr.bf16.mxu0 0
        %665 = vmatpush2.bf16.msra.mxu0 0
        %666 = vmatprep.mubr.bf16.mxu0 0
        %667 = vmatmul.mubr.bf16.gmra.mxu0 %v473
        %v668 = vpop.f32.mrf.mxu0
        %v669 = vadd.f32 0.0, %v668
        %v670 = vpop.f32.mrf.mxu0
        %v671 = vadd.f32 0.0, %v670
        %v672 = vpop.f32.mrf.mxu0
        %v673 = vadd.f32 0.0, %v672
        %v674 = vpop.f32.mrf.mxu0
        %v675 = vadd.f32 0.0, %v674
        %676 = vdwg.mxu0
        %677 = vmatprep.subr.bf16.mxu0 0
        %678 = vmatpush1.bf16.msra.mxu0 %v609
        %679 = vmatprep.subr.bf16.mxu0 0
        %680 = vmatpush1.bf16.msra.mxu0 %v606
        %681 = vmatprep.subr.bf16.mxu0 0
        %682 = vmatpush1.bf16.msra.mxu0 %v603
        %683 = vmatprep.subr.bf16.mxu0 0
        %684 = vmatpush1.bf16.msra.mxu0 %v600
        %685 = vmatprep.subr.bf16.mxu0 0
        %686 = vmatpush1.bf16.msra.mxu0 %v597
        %687 = vmatprep.subr.bf16.mxu0 0
        %688 = vmatpush1.bf16.msra.mxu0 %v594
        %689 = vmatprep.subr.bf16.mxu0 0
        %690 = vmatpush1.bf16.msra.mxu0 %v591
        %691 = vmatprep.subr.bf16.mxu0 0
        %692 = vmatpush1.bf16.msra.mxu0 %v588
        %693 = vmatprep.subr.bf16.mxu0 0
        %694 = vmatpush2.bf16.msra.mxu0 0
        %695 = vmatprep.subr.bf16.mxu0 0
        %696 = vmatpush2.bf16.msra.mxu0 0
        %697 = vmatprep.subr.bf16.mxu0 0
        %698 = vmatpush2.bf16.msra.mxu0 0
        %699 = vmatprep.subr.bf16.mxu0 0
        %700 = vmatpush2.bf16.msra.mxu0 0
        %701 = vmatprep.subr.bf16.mxu0 0
        %702 = vmatpush2.bf16.msra.mxu0 0
        %703 = vmatprep.subr.bf16.mxu0 0
        %704 = vmatpush2.bf16.msra.mxu0 0
        %705 = vmatprep.subr.bf16.mxu0 0
        %706 = vmatpush2.bf16.msra.mxu0 0
        %707 = vmatprep.subr.bf16.mxu0 0
        %708 = vmatpush2.bf16.msra.mxu0 0
        %709 = vmatprep.mubr.bf16.mxu0 0
        %710 = vmatmul.mubr.bf16.gmra.mxu0 %v473
        %v711 = vpop.f32.mrf.mxu0
        %v712 = vadd.f32 0.0, %v711
        %v713 = vpop.f32.mrf.mxu0
        %v714 = vpop.f32.mrf.mxu0
        %v715 = vadd.f32 0.0, %v714
        %v716 = vpop.f32.mrf.mxu0
        %717 = vdwg.mxu0
        %v718 = vld [vmem:[#allocation8] sm:$0xff]
        %v719 = vld [vmem:[#allocation8 + $0x8] sm:$0xff]
        %v720 = vld [vmem:[#allocation8 + $0x10] sm:$0xff]
        %v721 = vld [vmem:[#allocation8 + $0x18] sm:$0xff]
        %v722 = vld [vmem:[#allocation8 + $0x20] sm:$0xff]
        %v723 = vld [vmem:[#allocation8 + $0x28] sm:$0xff]
        %v724 = vld [vmem:[#allocation8 + $0x30] sm:$0xff]
        %v725 = vld [vmem:[#allocation8 + $0x38] sm:$0xff]
        %v726 = vld [vmem:[#allocation8 + $0x40] sm:$0xff]
        %v727 = vld [vmem:[#allocation8 + $0x48] sm:$0xff]
        %v728 = vld [vmem:[#allocation8 + $0x50] sm:$0xff]
        %v729 = vld [vmem:[#allocation8 + $0x58] sm:$0xff]
        %v730 = vld [vmem:[#allocation8 + $0x60] sm:$0xff]
        %v731 = vld [vmem:[#allocation8 + $0x68] sm:$0xff]
        %v732 = vld [vmem:[#allocation8 + $0x70] sm:$0xff]
        %v733 = vld [vmem:[#allocation8 + $0x78] sm:$0xff]
        %v734 = vmul.f32 %v669, %v718
        %v735 = vmul.f32 %v673, %v719
        %v736 = vmul.f32 %v669, %v720
        %v737 = vmul.f32 %v673, %v721
        %v738 = vmul.f32 %v669, %v722
        %v739 = vmul.f32 %v673, %v723
        %v740 = vmul.f32 %v669, %v724
        %v741 = vmul.f32 %v673, %v725
        %v742 = vmul.f32 %v669, %v726
        %v743 = vmul.f32 %v673, %v727
        %v744 = vmul.f32 %v669, %v728
        %v745 = vmul.f32 %v673, %v729
        %v746 = vmul.f32 %v669, %v730
        %v747 = vmul.f32 %v673, %v731
        %v748 = vmul.f32 %v669, %v732
        %v749 = vmul.f32 %v673, %v733
        %v750 = vpack.c.bf16 %v735, %v734
        %v751 = vpack.c.bf16 %v737, %v736
        %v752 = vpack.c.bf16 %v739, %v738
        %v753 = vpack.c.bf16 %v741, %v740
        %v754 = vpack.c.bf16 %v743, %v742
        %v755 = vpack.c.bf16 %v745, %v744
        %v756 = vpack.c.bf16 %v747, %v746
        %v757 = vpack.c.bf16 %v749, %v748
        %v758 = vpack.c.bf16 %v675, %v671
        %v759 = vld [vmem:[#allocation7] sm:$0xff]
        %v760 = vld [vmem:[#allocation7 + $0x8] sm:$0xff]
        %v761 = vld [vmem:[#allocation7 + $0x10] sm:$0xff]
        %v762 = vld [vmem:[#allocation7 + $0x18] sm:$0xff]
        %v763 = vld [vmem:[#allocation7 + $0x20] sm:$0xff]
        %v764 = vld [vmem:[#allocation7 + $0x28] sm:$0xff]
        %v765 = vld [vmem:[#allocation7 + $0x30] sm:$0xff]
        %v766 = vld [vmem:[#allocation7 + $0x38] sm:$0xff]
        %v767 = vld [vmem:[#allocation7 + $0x40] sm:$0xff]
        %v768 = vld [vmem:[#allocation7 + $0x48] sm:$0xff]
        %v769 = vld [vmem:[#allocation7 + $0x50] sm:$0xff]
        %v770 = vld [vmem:[#allocation7 + $0x58] sm:$0xff]
        %v771 = vld [vmem:[#allocation7 + $0x60] sm:$0xff]
        %v772 = vld [vmem:[#allocation7 + $0x68] sm:$0xff]
        %v773 = vld [vmem:[#allocation7 + $0x70] sm:$0xff]
        %v774 = vld [vmem:[#allocation7 + $0x78] sm:$0xff]
        %775 = vmatprep.subr.bf16.mxu0 0
        %776 = vmatpush1.bf16.xpose.msra.mxu0 %v758
        %777 = vmatprep.subr.bf16.mxu0 0
        %778 = vmatpush1.bf16.xpose.msra.mxu0 %v758
        %779 = vmatprep.subr.bf16.mxu0 0
        %780 = vmatpush1.bf16.xpose.msra.mxu0 %v758
        %781 = vmatprep.subr.bf16.mxu0 0
        %782 = vmatpush1.bf16.xpose.msra.mxu0 %v758
        %783 = vmatprep.subr.bf16.mxu0 0
        %784 = vmatpush1.bf16.xpose.msra.mxu0 %v758
        %785 = vmatprep.subr.bf16.mxu0 0
        %786 = vmatpush1.bf16.xpose.msra.mxu0 %v758
        %787 = vmatprep.subr.bf16.mxu0 0
        %788 = vmatpush1.bf16.xpose.msra.mxu0 %v758
        %789 = vmatprep.subr.bf16.mxu0 0
        %790 = vmatpush1.bf16.xpose.msra.mxu0 %v758
        %791 = vmatprep.subr.bf16.mxu0 0
        %792 = vmatpush2.bf16.xpose.msra.mxu0 0
        %793 = vmatprep.subr.bf16.mxu0 0
        %794 = vmatpush2.bf16.xpose.msra.mxu0 0
        %795 = vmatprep.subr.bf16.mxu0 0
        %796 = vmatpush2.bf16.xpose.msra.mxu0 0
        %797 = vmatprep.subr.bf16.mxu0 0
        %798 = vmatpush2.bf16.xpose.msra.mxu0 0
        %799 = vmatprep.subr.bf16.mxu0 0
        %800 = vmatpush2.bf16.xpose.msra.mxu0 0
        %801 = vmatprep.subr.bf16.mxu0 0
        %802 = vmatpush2.bf16.xpose.msra.mxu0 0
        %803 = vmatprep.subr.bf16.mxu0 0
        %804 = vmatpush2.bf16.xpose.msra.mxu0 0
        %805 = vmatprep.subr.bf16.mxu0 0
        %806 = vmatpush2.bf16.xpose.msra.mxu0 0
        %807 = vmatprep.mubr.bf16.mxu0 0
        %808 = vmatmul.mubr.bf16.gmra.mxu0 %v750
        %v809 = vpop.f32.mrf.mxu0
        %v810 = vadd.f32 %v759, %v809
        %v811 = vpop.f32.mrf.mxu0
        %v812 = vpop.f32.mrf.mxu0
        %v813 = vadd.f32 %v760, %v812
        %v814 = vpop.f32.mrf.mxu0
        %815 = vmatprep.mubr.bf16.mxu0 0
        %816 = vmatmul.mubr.bf16.gmra.mxu0 %v751
        %v817 = vpop.f32.mrf.mxu0
        %v818 = vadd.f32 %v761, %v817
        %v819 = vpop.f32.mrf.mxu0
        %v820 = vpop.f32.mrf.mxu0
        %v821 = vadd.f32 %v762, %v820
        %v822 = vpop.f32.mrf.mxu0
        %823 = vmatprep.mubr.bf16.mxu0 0
        %824 = vmatmul.mubr.bf16.gmra.mxu0 %v752
        %v825 = vpop.f32.mrf.mxu0
        %v826 = vadd.f32 %v763, %v825
        %v827 = vpop.f32.mrf.mxu0
        %v828 = vpop.f32.mrf.mxu0
        %v829 = vadd.f32 %v764, %v828
        %v830 = vpop.f32.mrf.mxu0
        %831 = vmatprep.mubr.bf16.mxu0 0
        %832 = vmatmul.mubr.bf16.gmra.mxu0 %v753
        %v833 = vpop.f32.mrf.mxu0
        %v834 = vadd.f32 %v765, %v833
        %v835 = vpop.f32.mrf.mxu0
        %v836 = vpop.f32.mrf.mxu0
        %v837 = vadd.f32 %v766, %v836
        %v838 = vpop.f32.mrf.mxu0
        %839 = vmatprep.mubr.bf16.mxu0 0
        %840 = vmatmul.mubr.bf16.gmra.mxu0 %v754
        %v841 = vpop.f32.mrf.mxu0
        %v842 = vadd.f32 %v767, %v841
        %v843 = vpop.f32.mrf.mxu0
        %v844 = vpop.f32.mrf.mxu0
        %v845 = vadd.f32 %v768, %v844
        %v846 = vpop.f32.mrf.mxu0
        %847 = vmatprep.mubr.bf16.mxu0 0
        %848 = vmatmul.mubr.bf16.gmra.mxu0 %v755
        %v849 = vpop.f32.mrf.mxu0
        %v850 = vadd.f32 %v769, %v849
        %v851 = vpop.f32.mrf.mxu0
        %v852 = vpop.f32.mrf.mxu0
        %v853 = vadd.f32 %v770, %v852
        %v854 = vpop.f32.mrf.mxu0
        %855 = vmatprep.mubr.bf16.mxu0 0
        %856 = vmatmul.mubr.bf16.gmra.mxu0 %v756
        %v857 = vpop.f32.mrf.mxu0
        %v858 = vadd.f32 %v771, %v857
        %v859 = vpop.f32.mrf.mxu0
        %v860 = vpop.f32.mrf.mxu0
        %v861 = vadd.f32 %v772, %v860
        %v862 = vpop.f32.mrf.mxu0
        %863 = vmatprep.mubr.bf16.mxu0 0
        %864 = vmatmul.mubr.bf16.gmra.mxu0 %v757
        %v865 = vpop.f32.mrf.mxu0
        %v866 = vadd.f32 %v773, %v865
        %v867 = vpop.f32.mrf.mxu0
        %v868 = vpop.f32.mrf.mxu0
        %v869 = vadd.f32 %v774, %v868
        %v870 = vpop.f32.mrf.mxu0
        %871 = vdwg.mxu0
        %872 = vmax.xlane.f32.xlu0 %v810
        %v873 = vpop.xlane.xlu0 %872
        %874 = vmax.xlane.f32.xlu0 %v813
        %v875 = vpop.xlane.xlu0 %874
        %876 = vmax.xlane.f32.xlu0 %v818
        %v877 = vpop.xlane.xlu0 %876
        %878 = vmax.xlane.f32.xlu0 %v821
        %v879 = vpop.xlane.xlu0 %878
        %880 = vmax.xlane.f32.xlu0 %v826
        %v881 = vpop.xlane.xlu0 %880
        %882 = vmax.xlane.f32.xlu0 %v829
        %v883 = vpop.xlane.xlu0 %882
        %884 = vmax.xlane.f32.xlu0 %v834
        %v885 = vpop.xlane.xlu0 %884
        %886 = vmax.xlane.f32.xlu0 %v837
        %v887 = vpop.xlane.xlu0 %886
        %888 = vmax.xlane.f32.xlu0 %v842
        %v889 = vpop.xlane.xlu0 %888
        %890 = vmax.xlane.f32.xlu0 %v845
        %v891 = vpop.xlane.xlu0 %890
        %892 = vmax.xlane.f32.xlu0 %v850
        %v893 = vpop.xlane.xlu0 %892
        %894 = vmax.xlane.f32.xlu0 %v853
        %v895 = vpop.xlane.xlu0 %894
        %896 = vmax.xlane.f32.xlu0 %v858
        %v897 = vpop.xlane.xlu0 %896
        %898 = vmax.xlane.f32.xlu0 %v861
        %v899 = vpop.xlane.xlu0 %898
        %900 = vmax.xlane.f32.xlu0 %v866
        %v901 = vpop.xlane.xlu0 %900
        %902 = vmax.xlane.f32.xlu0 %v869
        %v903 = vpop.xlane.xlu0 %902
        %v904 = vsub.f32 %v810, %v873
        %v905 = vsub.f32 %v813, %v875
        %v906 = vsub.f32 %v818, %v877
        %v907 = vsub.f32 %v821, %v879
        %v908 = vsub.f32 %v826, %v881
        %v909 = vsub.f32 %v829, %v883
        %v910 = vsub.f32 %v834, %v885
        %v911 = vsub.f32 %v837, %v887
        %v912 = vsub.f32 %v842, %v889
        %v913 = vsub.f32 %v845, %v891
        %v914 = vsub.f32 %v850, %v893
        %v915 = vsub.f32 %v853, %v895
        %v916 = vsub.f32 %v858, %v897
        %v917 = vsub.f32 %v861, %v899
        %v918 = vsub.f32 %v866, %v901
        %v919 = vsub.f32 %v869, %v903
        %v920 = vmul.f32 %v904, 1.442695
        %v921 = vpow.pop %v920
        %v922 = vmul.f32 %v905, 1.442695
        %v923 = vpow.pop %v922
        %v924 = vmul.f32 %v906, 1.442695
        %v925 = vpow.pop %v924
        %v926 = vmul.f32 %v907, 1.442695
        %v927 = vpow.pop %v926
        %v928 = vmul.f32 %v908, 1.442695
        %v929 = vpow.pop %v928
        %v930 = vmul.f32 %v909, 1.442695
        %v931 = vpow.pop %v930
        %v932 = vmul.f32 %v910, 1.442695
        %v933 = vpow.pop %v932
        %v934 = vmul.f32 %v911, 1.442695
        %v935 = vpow.pop %v934
        %v936 = vmul.f32 %v912, 1.442695
        %v937 = vpow.pop %v936
        %v938 = vmul.f32 %v913, 1.442695
        %v939 = vpow.pop %v938
        %v940 = vmul.f32 %v914, 1.442695
        %v941 = vpow.pop %v940
        %v942 = vmul.f32 %v915, 1.442695
        %v943 = vpow.pop %v942
        %v944 = vmul.f32 %v916, 1.442695
        %v945 = vpow.pop %v944
        %v946 = vmul.f32 %v917, 1.442695
        %v947 = vpow.pop %v946
        %v948 = vmul.f32 %v918, 1.442695
        %v949 = vpow.pop %v948
        %v950 = vmul.f32 %v919, 1.442695
        %v951 = vpow.pop %v950
        %952 = vadd.xlane.f32.xlu0 %v921
        %v953 = vpop.xlane.xlu0 %952
        %954 = vadd.xlane.f32.xlu0 %v923
        %v955 = vpop.xlane.xlu0 %954
        %956 = vadd.xlane.f32.xlu0 %v925
        %v957 = vpop.xlane.xlu0 %956
        %958 = vadd.xlane.f32.xlu0 %v927
        %v959 = vpop.xlane.xlu0 %958
        %960 = vadd.xlane.f32.xlu0 %v929
        %v961 = vpop.xlane.xlu0 %960
        %962 = vadd.xlane.f32.xlu0 %v931
        %v963 = vpop.xlane.xlu0 %962
        %964 = vadd.xlane.f32.xlu0 %v933
        %v965 = vpop.xlane.xlu0 %964
        %966 = vadd.xlane.f32.xlu0 %v935
        %v967 = vpop.xlane.xlu0 %966
        %968 = vadd.xlane.f32.xlu0 %v937
        %v969 = vpop.xlane.xlu0 %968
        %970 = vadd.xlane.f32.xlu0 %v939
        %v971 = vpop.xlane.xlu0 %970
        %972 = vadd.xlane.f32.xlu0 %v941
        %v973 = vpop.xlane.xlu0 %972
        %974 = vadd.xlane.f32.xlu0 %v943
        %v975 = vpop.xlane.xlu0 %974
        %976 = vadd.xlane.f32.xlu0 %v945
        %v977 = vpop.xlane.xlu0 %976
        %978 = vadd.xlane.f32.xlu0 %v947
        %v979 = vpop.xlane.xlu0 %978
        %980 = vadd.xlane.f32.xlu0 %v949
        %v981 = vpop.xlane.xlu0 %980
        %982 = vadd.xlane.f32.xlu0 %v951
        %v983 = vpop.xlane.xlu0 %982
        %v984 = vrcp.pop %v953
        %v985 = vrcp.pop %v955
        %v986 = vrcp.pop %v957
        %v987 = vrcp.pop %v959
        %v988 = vrcp.pop %v961
        %v989 = vrcp.pop %v963
        %v990 = vrcp.pop %v965
        %v991 = vrcp.pop %v967
        %v992 = vrcp.pop %v969
        %v993 = vrcp.pop %v971
        %v994 = vrcp.pop %v973
        %v995 = vrcp.pop %v975
        %v996 = vrcp.pop %v977
        %v997 = vrcp.pop %v979
        %v998 = vrcp.pop %v981
        %v999 = vrcp.pop %v983
        %v1000 = vmul.f32 %v921, %v984
        %v1001 = vmul.f32 %v923, %v985
        %v1002 = vmul.f32 %v925, %v986
        %v1003 = vmul.f32 %v927, %v987
        %v1004 = vmul.f32 %v929, %v988
        %v1005 = vmul.f32 %v931, %v989
        %v1006 = vmul.f32 %v933, %v990
        %v1007 = vmul.f32 %v935, %v991
        %v1008 = vmul.f32 %v937, %v992
        %v1009 = vmul.f32 %v939, %v993
        %v1010 = vmul.f32 %v941, %v994
        %v1011 = vmul.f32 %v943, %v995
        %v1012 = vmul.f32 %v945, %v996
        %v1013 = vmul.f32 %v947, %v997
        %v1014 = vmul.f32 %v949, %v998
        %v1015 = vmul.f32 %v951, %v999
        %v1016 = vpack.c.bf16 %v1001, %v1000
        %v1017 = vpack.c.bf16 %v1003, %v1002
        %v1018 = vpack.c.bf16 %v1005, %v1004
        %v1019 = vpack.c.bf16 %v1007, %v1006
        %v1020 = vpack.c.bf16 %v1009, %v1008
        %v1021 = vpack.c.bf16 %v1011, %v1010
        %v1022 = vpack.c.bf16 %v1013, %v1012
        %v1023 = vpack.c.bf16 %v1015, %v1014
        %v1024 = vpack.c.bf16 %v715, %v712
        %1025 = vmatprep.subr.bf16.mxu0 0
        %1026 = vmatpush1.bf16.msra.mxu0 %v1024
        %1027 = vmatprep.subr.bf16.mxu0 0
        %1028 = vmatpush1.bf16.msra.mxu0 %v1024
        %1029 = vmatprep.subr.bf16.mxu0 0
        %1030 = vmatpush1.bf16.msra.mxu0 %v1024
        %1031 = vmatprep.subr.bf16.mxu0 0
        %1032 = vmatpush1.bf16.msra.mxu0 %v1024
        %1033 = vmatprep.subr.bf16.mxu0 0
        %1034 = vmatpush1.bf16.msra.mxu0 %v1024
        %1035 = vmatprep.subr.bf16.mxu0 0
        %1036 = vmatpush1.bf16.msra.mxu0 %v1024
        %1037 = vmatprep.subr.bf16.mxu0 0
        %1038 = vmatpush1.bf16.msra.mxu0 %v1024
        %1039 = vmatprep.subr.bf16.mxu0 0
        %1040 = vmatpush1.bf16.msra.mxu0 %v1024
        %1041 = vmatprep.subr.bf16.mxu0 0
        %1042 = vmatpush2.bf16.msra.mxu0 0
        %1043 = vmatprep.subr.bf16.mxu0 0
        %1044 = vmatpush2.bf16.msra.mxu0 0
        %1045 = vmatprep.subr.bf16.mxu0 0
        %1046 = vmatpush2.bf16.msra.mxu0 0
        %1047 = vmatprep.subr.bf16.mxu0 0
        %1048 = vmatpush2.bf16.msra.mxu0 0
        %1049 = vmatprep.subr.bf16.mxu0 0
        %1050 = vmatpush2.bf16.msra.mxu0 0
        %1051 = vmatprep.subr.bf16.mxu0 0
        %1052 = vmatpush2.bf16.msra.mxu0 0
        %1053 = vmatprep.subr.bf16.mxu0 0
        %1054 = vmatpush2.bf16.msra.mxu0 0
        %1055 = vmatprep.subr.bf16.mxu0 0
        %1056 = vmatpush2.bf16.msra.mxu0 0
        %1057 = vmatprep.mubr.bf16.mxu0 0
        %1058 = vmatmul.mubr.bf16.gmra.mxu0 %v1016
        %v1059 = vpop.f32.mrf.mxu0
        %v1060 = vadd.f32 0.0, %v1059
        %v1061 = vpop.f32.mrf.mxu0
        %v1062 = vpop.f32.mrf.mxu0
        %v1063 = vadd.f32 0.0, %v1062
        %v1064 = vpop.f32.mrf.mxu0
        %1065 = vmatprep.mubr.bf16.mxu0 0
        %1066 = vmatmul.mubr.bf16.gmra.mxu0 %v1017
        %v1067 = vpop.f32.mrf.mxu0
        %v1068 = vadd.f32 0.0, %v1067
        %v1069 = vpop.f32.mrf.mxu0
        %v1070 = vpop.f32.mrf.mxu0
        %v1071 = vadd.f32 0.0, %v1070
        %v1072 = vpop.f32.mrf.mxu0
        %1073 = vmatprep.mubr.bf16.mxu0 0
        %1074 = vmatmul.mubr.bf16.gmra.mxu0 %v1018
        %v1075 = vpop.f32.mrf.mxu0
        %v1076 = vadd.f32 0.0, %v1075
        %v1077 = vpop.f32.mrf.mxu0
        %v1078 = vpop.f32.mrf.mxu0
        %v1079 = vadd.f32 0.0, %v1078
        %v1080 = vpop.f32.mrf.mxu0
        %1081 = vmatprep.mubr.bf16.mxu0 0
        %1082 = vmatmul.mubr.bf16.gmra.mxu0 %v1019
        %v1083 = vpop.f32.mrf.mxu0
        %v1084 = vadd.f32 0.0, %v1083
        %v1085 = vpop.f32.mrf.mxu0
        %v1086 = vpop.f32.mrf.mxu0
        %v1087 = vadd.f32 0.0, %v1086
        %v1088 = vpop.f32.mrf.mxu0
        %1089 = vmatprep.mubr.bf16.mxu0 0
        %1090 = vmatmul.mubr.bf16.gmra.mxu0 %v1020
        %v1091 = vpop.f32.mrf.mxu0
        %v1092 = vadd.f32 0.0, %v1091
        %v1093 = vpop.f32.mrf.mxu0
        %v1094 = vpop.f32.mrf.mxu0
        %v1095 = vadd.f32 0.0, %v1094
        %v1096 = vpop.f32.mrf.mxu0
        %1097 = vmatprep.mubr.bf16.mxu0 0
        %1098 = vmatmul.mubr.bf16.gmra.mxu0 %v1021
        %v1099 = vpop.f32.mrf.mxu0
        %v1100 = vadd.f32 0.0, %v1099
        %v1101 = vpop.f32.mrf.mxu0
        %v1102 = vpop.f32.mrf.mxu0
        %v1103 = vadd.f32 0.0, %v1102
        %v1104 = vpop.f32.mrf.mxu0
        %1105 = vmatprep.mubr.bf16.mxu0 0
        %1106 = vmatmul.mubr.bf16.gmra.mxu0 %v1022
        %v1107 = vpop.f32.mrf.mxu0
        %v1108 = vadd.f32 0.0, %v1107
        %v1109 = vpop.f32.mrf.mxu0
        %v1110 = vpop.f32.mrf.mxu0
        %v1111 = vadd.f32 0.0, %v1110
        %v1112 = vpop.f32.mrf.mxu0
        %1113 = vmatprep.mubr.bf16.mxu0 0
        %1114 = vmatmul.mubr.bf16.gmra.mxu0 %v1023
        %v1115 = vpop.f32.mrf.mxu0
        %v1116 = vadd.f32 0.0, %v1115
        %v1117 = vpop.f32.mrf.mxu0
        %v1118 = vpop.f32.mrf.mxu0
        %v1119 = vadd.f32 0.0, %v1118
        %v1120 = vpop.f32.mrf.mxu0
        %1121 = vdwg.mxu0
        %v1122 = vmul.f32 %v1060, %v718
        %v1123 = vmul.f32 %v1063, %v719
        %v1124 = vmul.f32 %v1068, %v720
        %v1125 = vmul.f32 %v1071, %v721
        %v1126 = vmul.f32 %v1076, %v722
        %v1127 = vmul.f32 %v1079, %v723
        %v1128 = vmul.f32 %v1084, %v724
        %v1129 = vmul.f32 %v1087, %v725
        %v1130 = vmul.f32 %v1092, %v726
        %v1131 = vmul.f32 %v1095, %v727
        %v1132 = vmul.f32 %v1100, %v728
        %v1133 = vmul.f32 %v1103, %v729
        %v1134 = vmul.f32 %v1108, %v730
        %v1135 = vmul.f32 %v1111, %v731
        %v1136 = vmul.f32 %v1116, %v732
        %v1137 = vmul.f32 %v1119, %v733
        %v1138 = vadd.f32 %v1122, %v1124
        %v1139 = vadd.f32 %v1123, %v1125
        %v1140 = vadd.f32 %v1138, %v1126
        %v1141 = vadd.f32 %v1139, %v1127
        %v1142 = vadd.f32 %v1140, %v1128
        %v1143 = vadd.f32 %v1141, %v1129
        %v1144 = vadd.f32 %v1142, %v1130
        %v1145 = vadd.f32 %v1143, %v1131
        %v1146 = vadd.f32 %v1144, %v1132
        %v1147 = vadd.f32 %v1145, %v1133
        %v1148 = vadd.f32 %v1146, %v1134
        %v1149 = vadd.f32 %v1147, %v1135
        %v1150 = vadd.f32 %v1148, %v1136
        %v1151 = vadd.f32 %v1149, %v1137
        %v1152 = vpack.c.bf16 %v1151, %v1150
        %v1153 = vld [vmem:[#allocation10] sm:$0xf]
        %v1154 = vld [vmem:[#allocation10 + $0x4] sm:$0xf]
        %v1155 = vld [vmem:[#allocation10 + $0x8] sm:$0xf]
        %v1156 = vld [vmem:[#allocation10 + $0xc] sm:$0xf]
        %v1157 = vld [vmem:[#allocation10 + $0x10] sm:$0xf]
        %v1158 = vld [vmem:[#allocation10 + $0x14] sm:$0xf]
        %v1159 = vld [vmem:[#allocation10 + $0x18] sm:$0xf]
        %v1160 = vld [vmem:[#allocation10 + $0x1c] sm:$0xf]
        %v1161 = vld [vmem:[#allocation10 + $0x20] sm:$0xf]
        %v1162 = vld [vmem:[#allocation10 + $0x24] sm:$0xf]
        %v1163 = vld [vmem:[#allocation10 + $0x28] sm:$0xf]
        %v1164 = vld [vmem:[#allocation10 + $0x2c] sm:$0xf]
        %v1165 = vld [vmem:[#allocation10 + $0x30] sm:$0xf]
        %v1166 = vld [vmem:[#allocation10 + $0x34] sm:$0xf]
        %v1167 = vld [vmem:[#allocation10 + $0x38] sm:$0xf]
        %v1168 = vld [vmem:[#allocation10 + $0x3c] sm:$0xf]
        %v1185 = vunpack.c.l.b16 %v1153
        %v1186 = vunpack.c.l.b16 %v1154
        %v1187 = vunpack.c.l.b16 %v1155
        %v1188 = vunpack.c.l.b16 %v1156
        %v1189 = vunpack.c.l.b16 %v1157
        %v1190 = vunpack.c.l.b16 %v1158
        %v1191 = vunpack.c.l.b16 %v1159
        %v1192 = vunpack.c.l.b16 %v1160
        %v1193 = vunpack.c.l.b16 %v1161
        %v1194 = vunpack.c.l.b16 %v1162
        %v1195 = vunpack.c.l.b16 %v1163
        %v1196 = vunpack.c.l.b16 %v1164
        %v1197 = vunpack.c.l.b16 %v1165
        %v1198 = vunpack.c.l.b16 %v1166
        %v1199 = vunpack.c.l.b16 %v1167
        %v1200 = vunpack.c.l.b16 %v1168
        %v1201 = vpack.c.b16 %v1186, %v1185
        %v1202 = vpack.c.b16 %v1188, %v1187
        %v1203 = vpack.c.b16 %v1190, %v1189
        %v1204 = vpack.c.b16 %v1192, %v1191
        %v1205 = vpack.c.b16 %v1194, %v1193
        %v1206 = vpack.c.b16 %v1196, %v1195
        %v1207 = vpack.c.b16 %v1198, %v1197
        %v1208 = vpack.c.b16 %v1200, %v1199
        %1217 = vmatprep.subr.bf16.mxu0 0
        %1218 = vmatpush1.bf16.msra.mxu0 %v1208
        %1219 = vmatprep.subr.bf16.mxu0 0
        %1220 = vmatpush1.bf16.msra.mxu0 %v1207
        %1221 = vmatprep.subr.bf16.mxu0 0
        %1222 = vmatpush1.bf16.msra.mxu0 %v1206
        %1223 = vmatprep.subr.bf16.mxu0 0
        %1224 = vmatpush1.bf16.msra.mxu0 %v1205
        %1225 = vmatprep.subr.bf16.mxu0 0
        %1226 = vmatpush1.bf16.msra.mxu0 %v1204
        %1227 = vmatprep.subr.bf16.mxu0 0
        %1228 = vmatpush1.bf16.msra.mxu0 %v1203
        %1229 = vmatprep.subr.bf16.mxu0 0
        %1230 = vmatpush1.bf16.msra.mxu0 %v1202
        %1231 = vmatprep.subr.bf16.mxu0 0
        %1232 = vmatpush1.bf16.msra.mxu0 %v1201
        %1233 = vmatprep.subr.bf16.mxu0 0
        %1234 = vmatpush2.bf16.msra.mxu0 0
        %1235 = vmatprep.subr.bf16.mxu0 0
        %1236 = vmatpush2.bf16.msra.mxu0 0
        %1237 = vmatprep.subr.bf16.mxu0 0
        %1238 = vmatpush2.bf16.msra.mxu0 0
        %1239 = vmatprep.subr.bf16.mxu0 0
        %1240 = vmatpush2.bf16.msra.mxu0 0
        %1241 = vmatprep.subr.bf16.mxu0 0
        %1242 = vmatpush2.bf16.msra.mxu0 0
        %1243 = vmatprep.subr.bf16.mxu0 0
        %1244 = vmatpush2.bf16.msra.mxu0 0
        %1245 = vmatprep.subr.bf16.mxu0 0
        %1246 = vmatpush2.bf16.msra.mxu0 0
        %1247 = vmatprep.subr.bf16.mxu0 0
        %1248 = vmatpush2.bf16.msra.mxu0 0
        %1249 = vmatprep.mubr.bf16.mxu0 0
        %1250 = vmatmul.mubr.bf16.gmra.mxu0 %v1152
        %v1251 = vpop.f32.mrf.mxu0
        %v1252 = vadd.f32 0.0, %v1251
        %v1253 = vpop.f32.mrf.mxu0
        %v1254 = vpop.f32.mrf.mxu0
        %v1255 = vadd.f32 0.0, %v1254
        %v1256 = vpop.f32.mrf.mxu0
        %1257 = vdwg.mxu0
        %v1258 = vadd.f32 %v439, %v1252
        %v1259 = vadd.f32 %v440, %v1255
        %v1260 = vld [vmem:[%s6] sm:$0x1]
        %1261 = vadd.xlane.f32.xlu0 %v1258
        %v1262 = vpop.xlane.xlu0 %1261
        %1263 = vadd.xlane.f32.xlu0 %v1259
        %v1264 = vpop.xlane.xlu0 %1263
        %v1265 = vmul.f32 %v1262, %v446
        %v1266 = vmul.f32 %v1264, %v446
        %v1267 = vsub.f32 %v1258, %v1265
        %v1268 = vsub.f32 %v1259, %v1266
        %v1269 = vmul.f32 %v1267, %v1267
        %v1270 = vmul.f32 %v1268, %v1268
        %1271 = vadd.xlane.f32.xlu0 %v1269
        %v1272 = vpop.xlane.xlu0 %1271
        %1273 = vadd.xlane.f32.xlu0 %v1270
        %v1274 = vpop.xlane.xlu0 %1273
        %v1275 = vmul.f32 %v1272, %v446
        %v1276 = vmul.f32 %v1274, %v446
        %v1277 = vadd.f32 %v1275, 1e-05
        %v1278 = vadd.f32 %v1276, 1e-05
        %v1279 = vrsqrt.pop %v1277
        %v1280 = vrsqrt.pop %v1278
        %v1281 = vmul.f32 %v1267, %v1279
        %v1282 = vmul.f32 %v1268, %v1280
        %v1284 = vlaneseq
        %v1285 = vshrl.u32 %v1284, 7
        %v1286 = vsub.s32 0, %v1285
        %v1287 = vrot.slane %v1260, %v1286
        %v1289 = vmul.f32 %v1281, %v1287
        %v1290 = vmul.f32 %v1282, %v1287
        %v1291 = vpack.c.bf16 %v1290, %v1289
        %v1292 = vld [vmem:[#allocation11] sm:$0xff]
        %v1293 = vld [vmem:[#allocation11 + $0x8] sm:$0xff]
        %v1294 = vld [vmem:[#allocation11 + $0x10] sm:$0xff]
        %v1295 = vld [vmem:[#allocation11 + $0x18] sm:$0xff]
        %v1296 = vld [vmem:[#allocation11 + $0x20] sm:$0xff]
        %v1297 = vld [vmem:[#allocation11 + $0x28] sm:$0xff]
        %v1298 = vld [vmem:[#allocation11 + $0x30] sm:$0xff]
        %v1299 = vld [vmem:[#allocation11 + $0x38] sm:$0xff]
        %v1300 = vld [vmem:[#allocation11 + $0x40] sm:$0xff]
        %v1301 = vld [vmem:[#allocation11 + $0x48] sm:$0xff]
        %v1302 = vld [vmem:[#allocation11 + $0x50] sm:$0xff]
        %v1303 = vld [vmem:[#allocation11 + $0x58] sm:$0xff]
        %v1304 = vld [vmem:[#allocation11 + $0x60] sm:$0xff]
        %v1305 = vld [vmem:[#allocation11 + $0x68] sm:$0xff]
        %v1306 = vld [vmem:[#allocation11 + $0x70] sm:$0xff]
        %v1307 = vld [vmem:[#allocation11 + $0x78] sm:$0xff]
        %v1308 = vld [vmem:[#allocation11 + $0x80] sm:$0xff]
        %v1309 = vld [vmem:[#allocation11 + $0x88] sm:$0xff]
        %v1310 = vld [vmem:[#allocation11 + $0x90] sm:$0xff]
        %v1311 = vld [vmem:[#allocation11 + $0x98] sm:$0xff]
        %v1312 = vld [vmem:[#allocation11 + $0xa0] sm:$0xff]
        %v1313 = vld [vmem:[#allocation11 + $0xa8] sm:$0xff]
        %v1314 = vld [vmem:[#allocation11 + $0xb0] sm:$0xff]
        %v1315 = vld [vmem:[#allocation11 + $0xb8] sm:$0xff]
        %v1316 = vld [vmem:[#allocation11 + $0xc0] sm:$0xff]
        %v1317 = vld [vmem:[#allocation11 + $0xc8] sm:$0xff]
        %v1318 = vld [vmem:[#allocation11 + $0xd0] sm:$0xff]
        %v1319 = vld [vmem:[#allocation11 + $0xd8] sm:$0xff]
        %v1320 = vld [vmem:[#allocation11 + $0xe0] sm:$0xff]
        %v1321 = vld [vmem:[#allocation11 + $0xe8] sm:$0xff]
        %v1322 = vld [vmem:[#allocation11 + $0xf0] sm:$0xff]
        %v1323 = vld [vmem:[#allocation11 + $0xf8] sm:$0xff]
        %v1356 = vunpack.c.l.b16 %v1292
        %v1357 = vunpack.c.h.b16 %v1292
        %v1358 = vunpack.c.l.b16 %v1293
        %v1359 = vunpack.c.h.b16 %v1293
        %v1360 = vunpack.c.l.b16 %v1294
        %v1361 = vunpack.c.h.b16 %v1294
        %v1362 = vunpack.c.l.b16 %v1295
        %v1363 = vunpack.c.h.b16 %v1295
        %v1364 = vunpack.c.l.b16 %v1296
        %v1365 = vunpack.c.h.b16 %v1296
        %v1366 = vunpack.c.l.b16 %v1297
        %v1367 = vunpack.c.h.b16 %v1297
        %v1368 = vunpack.c.l.b16 %v1298
        %v1369 = vunpack.c.h.b16 %v1298
        %v1370 = vunpack.c.l.b16 %v1299
        %v1371 = vunpack.c.h.b16 %v1299
        %v1372 = vunpack.c.l.b16 %v1300
        %v1373 = vunpack.c.h.b16 %v1300
        %v1374 = vunpack.c.l.b16 %v1301
        %v1375 = vunpack.c.h.b16 %v1301
        %v1376 = vunpack.c.l.b16 %v1302
        %v1377 = vunpack.c.h.b16 %v1302
        %v1378 = vunpack.c.l.b16 %v1303
        %v1379 = vunpack.c.h.b16 %v1303
        %v1380 = vunpack.c.l.b16 %v1304
        %v1381 = vunpack.c.h.b16 %v1304
        %v1382 = vunpack.c.l.b16 %v1305
        %v1383 = vunpack.c.h.b16 %v1305
        %v1384 = vunpack.c.l.b16 %v1306
        %v1385 = vunpack.c.h.b16 %v1306
        %v1386 = vunpack.c.l.b16 %v1307
        %v1387 = vunpack.c.h.b16 %v1307
        %v1388 = vunpack.c.l.b16 %v1308
        %v1389 = vunpack.c.h.b16 %v1308
        %v1390 = vunpack.c.l.b16 %v1309
        %v1391 = vunpack.c.h.b16 %v1309
        %v1392 = vunpack.c.l.b16 %v1310
        %v1393 = vunpack.c.h.b16 %v1310
        %v1394 = vunpack.c.l.b16 %v1311
        %v1395 = vunpack.c.h.b16 %v1311
        %v1396 = vunpack.c.l.b16 %v1312
        %v1397 = vunpack.c.h.b16 %v1312
        %v1398 = vunpack.c.l.b16 %v1313
        %v1399 = vunpack.c.h.b16 %v1313
        %v1400 = vunpack.c.l.b16 %v1314
        %v1401 = vunpack.c.h.b16 %v1314
        %v1402 = vunpack.c.l.b16 %v1315
        %v1403 = vunpack.c.h.b16 %v1315
        %v1404 = vunpack.c.l.b16 %v1316
        %v1405 = vunpack.c.h.b16 %v1316
        %v1406 = vunpack.c.l.b16 %v1317
        %v1407 = vunpack.c.h.b16 %v1317
        %v1408 = vunpack.c.l.b16 %v1318
        %v1409 = vunpack.c.h.b16 %v1318
        %v1410 = vunpack.c.l.b16 %v1319
        %v1411 = vunpack.c.h.b16 %v1319
        %v1412 = vunpack.c.l.b16 %v1320
        %v1413 = vunpack.c.h.b16 %v1320
        %v1414 = vunpack.c.l.b16 %v1321
        %v1415 = vunpack.c.h.b16 %v1321
        %v1416 = vunpack.c.l.b16 %v1322
        %v1417 = vunpack.c.h.b16 %v1322
        %v1418 = vunpack.c.l.b16 %v1323
        %v1419 = vunpack.c.h.b16 %v1323
        %v1420 = vpack.c.b16 %v1360, %v1356
        %v1421 = vpack.c.b16 %v1361, %v1357
        %v1422 = vpack.c.b16 %v1362, %v1358
        %v1423 = vpack.c.b16 %v1363, %v1359
        %v1424 = vpack.c.b16 %v1368, %v1364
        %v1425 = vpack.c.b16 %v1369, %v1365
        %v1426 = vpack.c.b16 %v1370, %v1366
        %v1427 = vpack.c.b16 %v1371, %v1367
        %v1428 = vpack.c.b16 %v1376, %v1372
        %v1429 = vpack.c.b16 %v1377, %v1373
        %v1430 = vpack.c.b16 %v1378, %v1374
        %v1431 = vpack.c.b16 %v1379, %v1375
        %v1432 = vpack.c.b16 %v1384, %v1380
        %v1433 = vpack.c.b16 %v1385, %v1381
        %v1434 = vpack.c.b16 %v1386, %v1382
        %v1435 = vpack.c.b16 %v1387, %v1383
        %v1436 = vpack.c.b16 %v1392, %v1388
        %v1437 = vpack.c.b16 %v1393, %v1389
        %v1438 = vpack.c.b16 %v1394, %v1390
        %v1439 = vpack.c.b16 %v1395, %v1391
        %v1440 = vpack.c.b16 %v1400, %v1396
        %v1441 = vpack.c.b16 %v1401, %v1397
        %v1442 = vpack.c.b16 %v1402, %v1398
        %v1443 = vpack.c.b16 %v1403, %v1399
        %v1444 = vpack.c.b16 %v1408, %v1404
        %v1445 = vpack.c.b16 %v1409, %v1405
        %v1446 = vpack.c.b16 %v1410, %v1406
        %v1447 = vpack.c.b16 %v1411, %v1407
        %v1448 = vpack.c.b16 %v1416, %v1412
        %v1449 = vpack.c.b16 %v1417, %v1413
        %v1450 = vpack.c.b16 %v1418, %v1414
        %v1451 = vpack.c.b16 %v1419, %v1415
        %1484 = vmatprep.subr.bf16.mxu0 %v1449
        %1485 = vmatpush1.bf16.msra.mxu0 %v1448
        %1486 = vmatprep.subr.bf16.mxu0 %v1445
        %1487 = vmatpush1.bf16.msra.mxu0 %v1444
        %1488 = vmatprep.subr.bf16.mxu0 %v1441
        %1489 = vmatpush1.bf16.msra.mxu0 %v1440
        %1490 = vmatprep.subr.bf16.mxu0 %v1437
        %1491 = vmatpush1.bf16.msra.mxu0 %v1436
        %1492 = vmatprep.subr.bf16.mxu0 %v1433
        %1493 = vmatpush1.bf16.msra.mxu0 %v1432
        %1494 = vmatprep.subr.bf16.mxu0 %v1429
        %1495 = vmatpush1.bf16.msra.mxu0 %v1428
        %1496 = vmatprep.subr.bf16.mxu0 %v1425
        %1497 = vmatpush1.bf16.msra.mxu0 %v1424
        %1498 = vmatprep.subr.bf16.mxu0 %v1421
        %1499 = vmatpush1.bf16.msra.mxu0 %v1420
        %1500 = vmatprep.subr.bf16.mxu0 0
        %1501 = vmatpush2.bf16.msra.mxu0 0
        %1502 = vmatprep.subr.bf16.mxu0 0
        %1503 = vmatpush2.bf16.msra.mxu0 0
        %1504 = vmatprep.subr.bf16.mxu0 0
        %1505 = vmatpush2.bf16.msra.mxu0 0
        %1506 = vmatprep.subr.bf16.mxu0 0
        %1507 = vmatpush2.bf16.msra.mxu0 0
        %1508 = vmatprep.subr.bf16.mxu0 0
        %1509 = vmatpush2.bf16.msra.mxu0 0
        %1510 = vmatprep.subr.bf16.mxu0 0
        %1511 = vmatpush2.bf16.msra.mxu0 0
        %1512 = vmatprep.subr.bf16.mxu0 0
        %1513 = vmatpush2.bf16.msra.mxu0 0
        %1514 = vmatprep.subr.bf16.mxu0 0
        %1515 = vmatpush2.bf16.msra.mxu0 0
        %1516 = vmatprep.mubr.bf16.mxu0 0
        %1517 = vmatmul.mubr.bf16.gmra.mxu0 %v1291
        %v1518 = vpop.f32.mrf.mxu0
        %v1519 = vadd.f32 0.0, %v1518
        %v1520 = vpop.f32.mrf.mxu0
        %v1521 = vadd.f32 0.0, %v1520
        %v1522 = vpop.f32.mrf.mxu0
        %v1523 = vadd.f32 0.0, %v1522
        %v1524 = vpop.f32.mrf.mxu0
        %v1525 = vadd.f32 0.0, %v1524
        %1526 = vdwg.mxu0
        %1527 = vmatprep.subr.bf16.mxu0 %v1451
        %1528 = vmatpush1.bf16.msra.mxu0 %v1450
        %1529 = vmatprep.subr.bf16.mxu0 %v1447
        %1530 = vmatpush1.bf16.msra.mxu0 %v1446
        %1531 = vmatprep.subr.bf16.mxu0 %v1443
        %1532 = vmatpush1.bf16.msra.mxu0 %v1442
        %1533 = vmatprep.subr.bf16.mxu0 %v1439
        %1534 = vmatpush1.bf16.msra.mxu0 %v1438
        %1535 = vmatprep.subr.bf16.mxu0 %v1435
        %1536 = vmatpush1.bf16.msra.mxu0 %v1434
        %1537 = vmatprep.subr.bf16.mxu0 %v1431
        %1538 = vmatpush1.bf16.msra.mxu0 %v1430
        %1539 = vmatprep.subr.bf16.mxu0 %v1427
        %1540 = vmatpush1.bf16.msra.mxu0 %v1426
        %1541 = vmatprep.subr.bf16.mxu0 %v1423
        %1542 = vmatpush1.bf16.msra.mxu0 %v1422
        %1543 = vmatprep.subr.bf16.mxu0 0
        %1544 = vmatpush2.bf16.msra.mxu0 0
        %1545 = vmatprep.subr.bf16.mxu0 0
        %1546 = vmatpush2.bf16.msra.mxu0 0
        %1547 = vmatprep.subr.bf16.mxu0 0
        %1548 = vmatpush2.bf16.msra.mxu0 0
        %1549 = vmatprep.subr.bf16.mxu0 0
        %1550 = vmatpush2.bf16.msra.mxu0 0
        %1551 = vmatprep.subr.bf16.mxu0 0
        %1552 = vmatpush2.bf16.msra.mxu0 0
        %1553 = vmatprep.subr.bf16.mxu0 0
        %1554 = vmatpush2.bf16.msra.mxu0 0
        %1555 = vmatprep.subr.bf16.mxu0 0
        %1556 = vmatpush2.bf16.msra.mxu0 0
        %1557 = vmatprep.subr.bf16.mxu0 0
        %1558 = vmatpush2.bf16.msra.mxu0 0
        %1559 = vmatprep.mubr.bf16.mxu0 0
        %1560 = vmatmul.mubr.bf16.gmra.mxu0 %v1291
        %v1561 = vpop.f32.mrf.mxu0
        %v1562 = vadd.f32 0.0, %v1561
        %v1563 = vpop.f32.mrf.mxu0
        %v1564 = vadd.f32 0.0, %v1563
        %v1565 = vpop.f32.mrf.mxu0
        %v1566 = vadd.f32 0.0, %v1565
        %v1567 = vpop.f32.mrf.mxu0
        %v1568 = vadd.f32 0.0, %v1567
        %1569 = vdwg.mxu0
        %v1570 = vmul.f32 %v1519, 0.5
        %v1571 = vmul.f32 %v1521, 0.5
        %v1572 = vmul.f32 %v1562, 0.5
        %v1573 = vmul.f32 %v1564, 0.5
        %v1574 = vmul.f32 %v1523, 0.5
        %v1575 = vmul.f32 %v1525, 0.5
        %v1576 = vmul.f32 %v1566, 0.5
        %v1577 = vmul.f32 %v1568, 0.5
        %v1578 = vmul.f32 %v1519, 0.70710677
        %v1579 = vmul.f32 %v1521, 0.70710677
        %v1580 = vmul.f32 %v1562, 0.70710677
        %v1581 = vmul.f32 %v1564, 0.70710677
        %v1582 = vmul.f32 %v1523, 0.70710677
        %v1583 = vmul.f32 %v1525, 0.70710677
        %v1584 = vmul.f32 %v1566, 0.70710677
        %v1585 = vmul.f32 %v1568, 0.70710677
        %v1586 = vand.u32 2147483647, %v1578
        %v1587 = vand.u32 2147483647, %v1579
        %v1588 = vand.u32 2147483647, %v1580
        %v1589 = vand.u32 2147483647, %v1581
        %v1590 = vand.u32 2147483647, %v1582
        %v1591 = vand.u32 2147483647, %v1583
        %v1592 = vand.u32 2147483647, %v1584
        %v1593 = vand.u32 2147483647, %v1585
        %v1594 = vmul.f32 %v1586, 0.3275911
        %v1595 = vmul.f32 %v1587, 0.3275911
        %v1596 = vmul.f32 %v1588, 0.3275911
        %v1597 = vmul.f32 %v1589, 0.3275911
        %v1598 = vmul.f32 %v1590, 0.3275911
        %v1599 = vmul.f32 %v1591, 0.3275911
        %v1600 = vmul.f32 %v1592, 0.3275911
        %v1601 = vmul.f32 %v1593, 0.3275911
        %v1602 = vadd.f32 %v1594, 1.0
        %v1603 = vadd.f32 %v1595, 1.0
        %v1604 = vadd.f32 %v1596, 1.0
        %v1605 = vadd.f32 %v1597, 1.0
        %v1606 = vadd.f32 %v1598, 1.0
        %v1607 = vadd.f32 %v1599, 1.0
        %v1608 = vadd.f32 %v1600, 1.0
        %v1609 = vadd.f32 %v1601, 1.0
        %v1610 = vrcp.pop %v1602
        %v1611 = vmul.f32 1.0, %v1610
        %v1612 = vrcp.pop %v1603
        %v1613 = vmul.f32 1.0, %v1612
        %v1614 = vrcp.pop %v1604
        %v1615 = vmul.f32 1.0, %v1614
        %v1616 = vrcp.pop %v1605
        %v1617 = vmul.f32 1.0, %v1616
        %v1618 = vrcp.pop %v1606
        %v1619 = vmul.f32 1.0, %v1618
        %v1620 = vrcp.pop %v1607
        %v1621 = vmul.f32 1.0, %v1620
        %v1622 = vrcp.pop %v1608
        %v1623 = vmul.f32 1.0, %v1622
        %v1624 = vrcp.pop %v1609
        %v1625 = vmul.f32 1.0, %v1624
        %v1626 = vmul.f32 %v1611, 1.0614054
        %v1627 = vmul.f32 %v1613, 1.0614054
        %v1628 = vmul.f32 %v1615, 1.0614054
        %v1629 = vmul.f32 %v1617, 1.0614054
        %v1630 = vmul.f32 %v1619, 1.0614054
        %v1631 = vmul.f32 %v1621, 1.0614054
        %v1632 = vmul.f32 %v1623, 1.0614054
        %v1633 = vmul.f32 %v1625, 1.0614054
        %v1634 = vadd.f32 %v1626, -1.4531521
        %v1635 = vadd.f32 %v1627, -1.4531521
        %v1636 = vadd.f32 %v1628, -1.4531521
        %v1637 = vadd.f32 %v1629, -1.4531521
        %v1638 = vadd.f32 %v1630, -1.4531521
        %v1639 = vadd.f32 %v1631, -1.4531521
        %v1640 = vadd.f32 %v1632, -1.4531521
        %v1641 = vadd.f32 %v1633, -1.4531521
        %v1642 = vmul.f32 %v1634, %v1611
        %v1643 = vmul.f32 %v1635, %v1613
        %v1644 = vmul.f32 %v1636, %v1615
        %v1645 = vmul.f32 %v1637, %v1617
        %v1646 = vmul.f32 %v1638, %v1619
        %v1647 = vmul.f32 %v1639, %v1621
        %v1648 = vmul.f32 %v1640, %v1623
        %v1649 = vmul.f32 %v1641, %v1625
        %v1650 = vadd.f32 %v1642, 1.4214138
        %v1651 = vadd.f32 %v1643, 1.4214138
        %v1652 = vadd.f32 %v1644, 1.4214138
        %v1653 = vadd.f32 %v1645, 1.4214138
        %v1654 = vadd.f32 %v1646, 1.4214138
        %v1655 = vadd.f32 %v1647, 1.4214138
        %v1656 = vadd.f32 %v1648, 1.4214138
        %v1657 = vadd.f32 %v1649, 1.4214138
        %v1658 = vmul.f32 %v1650, %v1611
        %v1659 = vmul.f32 %v1651, %v1613
        %v1660 = vmul.f32 %v1652, %v1615
        %v1661 = vmul.f32 %v1653, %v1617
        %v1662 = vmul.f32 %v1654, %v1619
        %v1663 = vmul.f32 %v1655, %v1621
        %v1664 = vmul.f32 %v1656, %v1623
        %v1665 = vmul.f32 %v1657, %v1625
        %v1666 = vadd.f32 %v1658, -0.28449672
        %v1667 = vadd.f32 %v1659, -0.28449672
        %v1668 = vadd.f32 %v1660, -0.28449672
        %v1669 = vadd.f32 %v1661, -0.28449672
        %v1670 = vadd.f32 %v1662, -0.28449672
        %v1671 = vadd.f32 %v1663, -0.28449672
        %v1672 = vadd.f32 %v1664, -0.28449672
        %v1673 = vadd.f32 %v1665, -0.28449672
        %v1674 = vmul.f32 %v1666, %v1611
        %v1675 = vmul.f32 %v1667, %v1613
        %v1676 = vmul.f32 %v1668, %v1615
        %v1677 = vmul.f32 %v1669, %v1617
        %v1678 = vmul.f32 %v1670, %v1619
        %v1679 = vmul.f32 %v1671, %v1621
        %v1680 = vmul.f32 %v1672, %v1623
        %v1681 = vmul.f32 %v1673, %v1625
        %v1682 = vadd.f32 %v1674, 0.2548296
        %v1683 = vadd.f32 %v1675, 0.2548296
        %v1684 = vadd.f32 %v1676, 0.2548296
        %v1685 = vadd.f32 %v1677, 0.2548296
        %v1686 = vadd.f32 %v1678, 0.2548296
        %v1687 = vadd.f32 %v1679, 0.2548296
        %v1688 = vadd.f32 %v1680, 0.2548296
        %v1689 = vadd.f32 %v1681, 0.2548296
        %v1690 = vmul.f32 %v1682, %v1611
        %v1691 = vmul.f32 %v1683, %v1613
        %v1692 = vmul.f32 %v1684, %v1615
        %v1693 = vmul.f32 %v1685, %v1617
        %v1694 = vmul.f32 %v1686, %v1619
        %v1695 = vmul.f32 %v1687, %v1621
        %v1696 = vmul.f32 %v1688, %v1623
        %v1697 = vmul.f32 %v1689, %v1625
        %v1698 = vsub.f32 0.0, %v1586
        %v1699 = vsub.f32 0.0, %v1587
        %v1700 = vsub.f32 0.0, %v1588
        %v1701 = vsub.f32 0.0, %v1589
        %v1702 = vsub.f32 0.0, %v1590
        %v1703 = vsub.f32 0.0, %v1591
        %v1704 = vsub.f32 0.0, %v1592
        %v1705 = vsub.f32 0.0, %v1593
        %v1706 = vmul.f32 %v1698, %v1586
        %v1707 = vmul.f32 %v1699, %v1587
        %v1708 = vmul.f32 %v1700, %v1588
        %v1709 = vmul.f32 %v1701, %v1589
        %v1710 = vmul.f32 %v1702, %v1590
        %v1711 = vmul.f32 %v1703, %v1591
        %v1712 = vmul.f32 %v1704, %v1592
        %v1713 = vmul.f32 %v1705, %v1593
        %v1714 = vmul.f32 %v1706, 1.442695
        %v1715 = vpow.pop %v1714
        %v1716 = vmul.f32 %v1707, 1.442695
        %v1717 = vpow.pop %v1716
        %v1718 = vmul.f32 %v1708, 1.442695
        %v1719 = vpow.pop %v1718
        %v1720 = vmul.f32 %v1709, 1.442695
        %v1721 = vpow.pop %v1720
        %v1722 = vmul.f32 %v1710, 1.442695
        %v1723 = vpow.pop %v1722
        %v1724 = vmul.f32 %v1711, 1.442695
        %v1725 = vpow.pop %v1724
        %v1726 = vmul.f32 %v1712, 1.442695
        %v1727 = vpow.pop %v1726
        %v1728 = vmul.f32 %v1713, 1.442695
        %v1729 = vpow.pop %v1728
        %v1730 = vmul.f32 %v1690, %v1715
        %v1731 = vmul.f32 %v1691, %v1717
        %v1732 = vmul.f32 %v1692, %v1719
        %v1733 = vmul.f32 %v1693, %v1721
        %v1734 = vmul.f32 %v1694, %v1723
        %v1735 = vmul.f32 %v1695, %v1725
        %v1736 = vmul.f32 %v1696, %v1727
        %v1737 = vmul.f32 %v1697, %v1729
        %v1738 = vsub.f32 1.0, %v1730
        %v1739 = vsub.f32 1.0, %v1731
        %v1740 = vsub.f32 1.0, %v1732
        %v1741 = vsub.f32 1.0, %v1733
        %v1742 = vsub.f32 1.0, %v1734
        %v1743 = vsub.f32 1.0, %v1735
        %v1744 = vsub.f32 1.0, %v1736
        %v1745 = vsub.f32 1.0, %v1737
        %vm1746 = vcmp.lt.f32.partialorder %v1578, 0.0
        %vm1747 = vcmp.lt.f32.partialorder %v1579, 0.0
        %vm1748 = vcmp.lt.f32.partialorder %v1580, 0.0
        %vm1749 = vcmp.lt.f32.partialorder %v1581, 0.0
        %vm1750 = vcmp.lt.f32.partialorder %v1582, 0.0
        %vm1751 = vcmp.lt.f32.partialorder %v1583, 0.0
        %vm1752 = vcmp.lt.f32.partialorder %v1584, 0.0
        %vm1753 = vcmp.lt.f32.partialorder %v1585, 0.0
        %v1754 = vsub.f32 0.0, %v1738
        %v1755 = vsub.f32 0.0, %v1739
        %v1756 = vsub.f32 0.0, %v1740
        %v1757 = vsub.f32 0.0, %v1741
        %v1758 = vsub.f32 0.0, %v1742
        %v1759 = vsub.f32 0.0, %v1743
        %v1760 = vsub.f32 0.0, %v1744
        %v1761 = vsub.f32 0.0, %v1745
        %v1762 = vsel %vm1746, %v1754, %v1738
        %v1763 = vsel %vm1747, %v1755, %v1739
        %v1764 = vsel %vm1748, %v1756, %v1740
        %v1765 = vsel %vm1749, %v1757, %v1741
        %v1766 = vsel %vm1750, %v1758, %v1742
        %v1767 = vsel %vm1751, %v1759, %v1743
        %v1768 = vsel %vm1752, %v1760, %v1744
        %v1769 = vsel %vm1753, %v1761, %v1745
        %v1770 = vadd.f32 %v1762, 1.0
        %v1771 = vadd.f32 %v1763, 1.0
        %v1772 = vadd.f32 %v1764, 1.0
        %v1773 = vadd.f32 %v1765, 1.0
        %v1774 = vadd.f32 %v1766, 1.0
        %v1775 = vadd.f32 %v1767, 1.0
        %v1776 = vadd.f32 %v1768, 1.0
        %v1777 = vadd.f32 %v1769, 1.0
        %v1778 = vmul.f32 %v1570, %v1770
        %v1779 = vmul.f32 %v1571, %v1771
        %v1780 = vmul.f32 %v1572, %v1772
        %v1781 = vmul.f32 %v1573, %v1773
        %v1782 = vmul.f32 %v1574, %v1774
        %v1783 = vmul.f32 %v1575, %v1775
        %v1784 = vmul.f32 %v1576, %v1776
        %v1785 = vmul.f32 %v1577, %v1777
        %v1786 = vpack.c.bf16 %v1782, %v1778
        %v1787 = vpack.c.bf16 %v1783, %v1779
        %v1788 = vpack.c.bf16 %v1784, %v1780
        %v1789 = vpack.c.bf16 %v1785, %v1781
        %v1790 = vld [vmem:[#allocation13] sm:$0xf]
        %v1791 = vld [vmem:[#allocation13 + $0x4] sm:$0xf]
        %v1792 = vld [vmem:[#allocation13 + $0x8] sm:$0xf]
        %v1793 = vld [vmem:[#allocation13 + $0xc] sm:$0xf]
        %v1794 = vld [vmem:[#allocation13 + $0x10] sm:$0xf]
        %v1795 = vld [vmem:[#allocation13 + $0x14] sm:$0xf]
        %v1796 = vld [vmem:[#allocation13 + $0x18] sm:$0xf]
        %v1797 = vld [vmem:[#allocation13 + $0x1c] sm:$0xf]
        %v1798 = vld [vmem:[#allocation13 + $0x20] sm:$0xf]
        %v1799 = vld [vmem:[#allocation13 + $0x24] sm:$0xf]
        %v1800 = vld [vmem:[#allocation13 + $0x28] sm:$0xf]
        %v1801 = vld [vmem:[#allocation13 + $0x2c] sm:$0xf]
        %v1802 = vld [vmem:[#allocation13 + $0x30] sm:$0xf]
        %v1803 = vld [vmem:[#allocation13 + $0x34] sm:$0xf]
        %v1804 = vld [vmem:[#allocation13 + $0x38] sm:$0xf]
        %v1805 = vld [vmem:[#allocation13 + $0x3c] sm:$0xf]
        %v1806 = vld [vmem:[#allocation13 + $0x40] sm:$0xf]
        %v1807 = vld [vmem:[#allocation13 + $0x44] sm:$0xf]
        %v1808 = vld [vmem:[#allocation13 + $0x48] sm:$0xf]
        %v1809 = vld [vmem:[#allocation13 + $0x4c] sm:$0xf]
        %v1810 = vld [vmem:[#allocation13 + $0x50] sm:$0xf]
        %v1811 = vld [vmem:[#allocation13 + $0x54] sm:$0xf]
        %v1812 = vld [vmem:[#allocation13 + $0x58] sm:$0xf]
        %v1813 = vld [vmem:[#allocation13 + $0x5c] sm:$0xf]
        %v1814 = vld [vmem:[#allocation13 + $0x60] sm:$0xf]
        %v1815 = vld [vmem:[#allocation13 + $0x64] sm:$0xf]
        %v1816 = vld [vmem:[#allocation13 + $0x68] sm:$0xf]
        %v1817 = vld [vmem:[#allocation13 + $0x6c] sm:$0xf]
        %v1818 = vld [vmem:[#allocation13 + $0x70] sm:$0xf]
        %v1819 = vld [vmem:[#allocation13 + $0x74] sm:$0xf]
        %v1820 = vld [vmem:[#allocation13 + $0x78] sm:$0xf]
        %v1821 = vld [vmem:[#allocation13 + $0x7c] sm:$0xf]
        %v1822 = vld [vmem:[#allocation13 + $0x80] sm:$0xf]
        %v1823 = vld [vmem:[#allocation13 + $0x84] sm:$0xf]
        %v1824 = vld [vmem:[#allocation13 + $0x88] sm:$0xf]
        %v1825 = vld [vmem:[#allocation13 + $0x8c] sm:$0xf]
        %v1826 = vld [vmem:[#allocation13 + $0x90] sm:$0xf]
        %v1827 = vld [vmem:[#allocation13 + $0x94] sm:$0xf]
        %v1828 = vld [vmem:[#allocation13 + $0x98] sm:$0xf]
        %v1829 = vld [vmem:[#allocation13 + $0x9c] sm:$0xf]
        %v1830 = vld [vmem:[#allocation13 + $0xa0] sm:$0xf]
        %v1831 = vld [vmem:[#allocation13 + $0xa4] sm:$0xf]
        %v1832 = vld [vmem:[#allocation13 + $0xa8] sm:$0xf]
        %v1833 = vld [vmem:[#allocation13 + $0xac] sm:$0xf]
        %v1834 = vld [vmem:[#allocation13 + $0xb0] sm:$0xf]
        %v1835 = vld [vmem:[#allocation13 + $0xb4] sm:$0xf]
        %v1836 = vld [vmem:[#allocation13 + $0xb8] sm:$0xf]
        %v1837 = vld [vmem:[#allocation13 + $0xbc] sm:$0xf]
        %v1838 = vld [vmem:[#allocation13 + $0xc0] sm:$0xf]
        %v1839 = vld [vmem:[#allocation13 + $0xc4] sm:$0xf]
        %v1840 = vld [vmem:[#allocation13 + $0xc8] sm:$0xf]
        %v1841 = vld [vmem:[#allocation13 + $0xcc] sm:$0xf]
        %v1842 = vld [vmem:[#allocation13 + $0xd0] sm:$0xf]
        %v1843 = vld [vmem:[#allocation13 + $0xd4] sm:$0xf]
        %v1844 = vld [vmem:[#allocation13 + $0xd8] sm:$0xf]
        %v1845 = vld [vmem:[#allocation13 + $0xdc] sm:$0xf]
        %v1846 = vld [vmem:[#allocation13 + $0xe0] sm:$0xf]
        %v1847 = vld [vmem:[#allocation13 + $0xe4] sm:$0xf]
        %v1848 = vld [vmem:[#allocation13 + $0xe8] sm:$0xf]
        %v1849 = vld [vmem:[#allocation13 + $0xec] sm:$0xf]
        %v1850 = vld [vmem:[#allocation13 + $0xf0] sm:$0xf]
        %v1851 = vld [vmem:[#allocation13 + $0xf4] sm:$0xf]
        %v1852 = vld [vmem:[#allocation13 + $0xf8] sm:$0xf]
        %v1853 = vld [vmem:[#allocation13 + $0xfc] sm:$0xf]
        %v1918 = vunpack.c.l.b16 %v1790
        %v1919 = vunpack.c.l.b16 %v1791
        %v1920 = vunpack.c.l.b16 %v1792
        %v1921 = vunpack.c.l.b16 %v1793
        %v1922 = vunpack.c.l.b16 %v1794
        %v1923 = vunpack.c.l.b16 %v1795
        %v1924 = vunpack.c.l.b16 %v1796
        %v1925 = vunpack.c.l.b16 %v1797
        %v1926 = vunpack.c.l.b16 %v1798
        %v1927 = vunpack.c.l.b16 %v1799
        %v1928 = vunpack.c.l.b16 %v1800
        %v1929 = vunpack.c.l.b16 %v1801
        %v1930 = vunpack.c.l.b16 %v1802
        %v1931 = vunpack.c.l.b16 %v1803
        %v1932 = vunpack.c.l.b16 %v1804
        %v1933 = vunpack.c.l.b16 %v1805
        %v1934 = vunpack.c.l.b16 %v1806
        %v1935 = vunpack.c.l.b16 %v1807
        %v1936 = vunpack.c.l.b16 %v1808
        %v1937 = vunpack.c.l.b16 %v1809
        %v1938 = vunpack.c.l.b16 %v1810
        %v1939 = vunpack.c.l.b16 %v1811
        %v1940 = vunpack.c.l.b16 %v1812
        %v1941 = vunpack.c.l.b16 %v1813
        %v1942 = vunpack.c.l.b16 %v1814
        %v1943 = vunpack.c.l.b16 %v1815
        %v1944 = vunpack.c.l.b16 %v1816
        %v1945 = vunpack.c.l.b16 %v1817
        %v1946 = vunpack.c.l.b16 %v1818
        %v1947 = vunpack.c.l.b16 %v1819
        %v1948 = vunpack.c.l.b16 %v1820
        %v1949 = vunpack.c.l.b16 %v1821
        %v1950 = vunpack.c.l.b16 %v1822
        %v1951 = vunpack.c.l.b16 %v1823
        %v1952 = vunpack.c.l.b16 %v1824
        %v1953 = vunpack.c.l.b16 %v1825
        %v1954 = vunpack.c.l.b16 %v1826
        %v1955 = vunpack.c.l.b16 %v1827
        %v1956 = vunpack.c.l.b16 %v1828
        %v1957 = vunpack.c.l.b16 %v1829
        %v1958 = vunpack.c.l.b16 %v1830
        %v1959 = vunpack.c.l.b16 %v1831
        %v1960 = vunpack.c.l.b16 %v1832
        %v1961 = vunpack.c.l.b16 %v1833
        %v1962 = vunpack.c.l.b16 %v1834
        %v1963 = vunpack.c.l.b16 %v1835
        %v1964 = vunpack.c.l.b16 %v1836
        %v1965 = vunpack.c.l.b16 %v1837
        %v1966 = vunpack.c.l.b16 %v1838
        %v1967 = vunpack.c.l.b16 %v1839
        %v1968 = vunpack.c.l.b16 %v1840
        %v1969 = vunpack.c.l.b16 %v1841
        %v1970 = vunpack.c.l.b16 %v1842
        %v1971 = vunpack.c.l.b16 %v1843
        %v1972 = vunpack.c.l.b16 %v1844
        %v1973 = vunpack.c.l.b16 %v1845
        %v1974 = vunpack.c.l.b16 %v1846
        %v1975 = vunpack.c.l.b16 %v1847
        %v1976 = vunpack.c.l.b16 %v1848
        %v1977 = vunpack.c.l.b16 %v1849
        %v1978 = vunpack.c.l.b16 %v1850
        %v1979 = vunpack.c.l.b16 %v1851
        %v1980 = vunpack.c.l.b16 %v1852
        %v1981 = vunpack.c.l.b16 %v1853
        %v1982 = vpack.c.b16 %v1919, %v1918
        %v1983 = vpack.c.b16 %v1921, %v1920
        %v1984 = vpack.c.b16 %v1923, %v1922
        %v1985 = vpack.c.b16 %v1925, %v1924
        %v1986 = vpack.c.b16 %v1927, %v1926
        %v1987 = vpack.c.b16 %v1929, %v1928
        %v1988 = vpack.c.b16 %v1931, %v1930
        %v1989 = vpack.c.b16 %v1933, %v1932
        %v1990 = vpack.c.b16 %v1935, %v1934
        %v1991 = vpack.c.b16 %v1937, %v1936
        %v1992 = vpack.c.b16 %v1939, %v1938
        %v1993 = vpack.c.b16 %v1941, %v1940
        %v1994 = vpack.c.b16 %v1943, %v1942
        %v1995 = vpack.c.b16 %v1945, %v1944
        %v1996 = vpack.c.b16 %v1947, %v1946
        %v1997 = vpack.c.b16 %v1949, %v1948
        %v1998 = vpack.c.b16 %v1951, %v1950
        %v1999 = vpack.c.b16 %v1953, %v1952
        %v2000 = vpack.c.b16 %v1955, %v1954
        %v2001 = vpack.c.b16 %v1957, %v1956
        %v2002 = vpack.c.b16 %v1959, %v1958
        %v2003 = vpack.c.b16 %v1961, %v1960
        %v2004 = vpack.c.b16 %v1963, %v1962
        %v2005 = vpack.c.b16 %v1965, %v1964
        %v2006 = vpack.c.b16 %v1967, %v1966
        %v2007 = vpack.c.b16 %v1969, %v1968
        %v2008 = vpack.c.b16 %v1971, %v1970
        %v2009 = vpack.c.b16 %v1973, %v1972
        %v2010 = vpack.c.b16 %v1975, %v1974
        %v2011 = vpack.c.b16 %v1977, %v1976
        %v2012 = vpack.c.b16 %v1979, %v1978
        %v2013 = vpack.c.b16 %v1981, %v1980
        %2046 = vmatprep.subr.bf16.mxu0 0
        %2047 = vmatpush1.bf16.msra.mxu0 %v1989
        %2048 = vmatprep.subr.bf16.mxu0 0
        %2049 = vmatpush1.bf16.msra.mxu0 %v1988
        %2050 = vmatprep.subr.bf16.mxu0 0
        %2051 = vmatpush1.bf16.msra.mxu0 %v1987
        %2052 = vmatprep.subr.bf16.mxu0 0
        %2053 = vmatpush1.bf16.msra.mxu0 %v1986
        %2054 = vmatprep.subr.bf16.mxu0 0
        %2055 = vmatpush1.bf16.msra.mxu0 %v1985
        %2056 = vmatprep.subr.bf16.mxu0 0
        %2057 = vmatpush1.bf16.msra.mxu0 %v1984
        %2058 = vmatprep.subr.bf16.mxu0 0
        %2059 = vmatpush1.bf16.msra.mxu0 %v1983
        %2060 = vmatprep.subr.bf16.mxu0 0
        %2061 = vmatpush1.bf16.msra.mxu0 %v1982
        %2062 = vmatprep.subr.bf16.mxu0 0
        %2063 = vmatpush2.bf16.msra.mxu0 %v1997
        %2064 = vmatprep.subr.bf16.mxu0 0
        %2065 = vmatpush2.bf16.msra.mxu0 %v1996
        %2066 = vmatprep.subr.bf16.mxu0 0
        %2067 = vmatpush2.bf16.msra.mxu0 %v1995
        %2068 = vmatprep.subr.bf16.mxu0 0
        %2069 = vmatpush2.bf16.msra.mxu0 %v1994
        %2070 = vmatprep.subr.bf16.mxu0 0
        %2071 = vmatpush2.bf16.msra.mxu0 %v1993
        %2072 = vmatprep.subr.bf16.mxu0 0
        %2073 = vmatpush2.bf16.msra.mxu0 %v1992
        %2074 = vmatprep.subr.bf16.mxu0 0
        %2075 = vmatpush2.bf16.msra.mxu0 %v1991
        %2076 = vmatprep.subr.bf16.mxu0 0
        %2077 = vmatpush2.bf16.msra.mxu0 %v1990
        %2078 = vmatprep.mubr.bf16.mxu0 %v1787
        %2079 = vmatmul.mubr.bf16.gmra.mxu0 %v1786
        %v2080 = vpop.f32.mrf.mxu0
        %v2081 = vadd.f32 0.0, %v2080
        %v2082 = vpop.f32.mrf.mxu0
        %v2083 = vpop.f32.mrf.mxu0
        %v2084 = vadd.f32 0.0, %v2083
        %v2085 = vpop.f32.mrf.mxu0
        %2086 = vdwg.mxu0
        %2087 = vmatprep.subr.bf16.mxu0 0
        %2088 = vmatpush1.bf16.msra.mxu0 %v2005
        %2089 = vmatprep.subr.bf16.mxu0 0
        %2090 = vmatpush1.bf16.msra.mxu0 %v2004
        %2091 = vmatprep.subr.bf16.mxu0 0
        %2092 = vmatpush1.bf16.msra.mxu0 %v2003
        %2093 = vmatprep.subr.bf16.mxu0 0
        %2094 = vmatpush1.bf16.msra.mxu0 %v2002
        %2095 = vmatprep.subr.bf16.mxu0 0
        %2096 = vmatpush1.bf16.msra.mxu0 %v2001
        %2097 = vmatprep.subr.bf16.mxu0 0
        %2098 = vmatpush1.bf16.msra.mxu0 %v2000
        %2099 = vmatprep.subr.bf16.mxu0 0
        %2100 = vmatpush1.bf16.msra.mxu0 %v1999
        %2101 = vmatprep.subr.bf16.mxu0 0
        %2102 = vmatpush1.bf16.msra.mxu0 %v1998
        %2103 = vmatprep.subr.bf16.mxu0 0
        %2104 = vmatpush2.bf16.msra.mxu0 %v2013
        %2105 = vmatprep.subr.bf16.mxu0 0
        %2106 = vmatpush2.bf16.msra.mxu0 %v2012
        %2107 = vmatprep.subr.bf16.mxu0 0
        %2108 = vmatpush2.bf16.msra.mxu0 %v2011
        %2109 = vmatprep.subr.bf16.mxu0 0
        %2110 = vmatpush2.bf16.msra.mxu0 %v2010
        %2111 = vmatprep.subr.bf16.mxu0 0
        %2112 = vmatpush2.bf16.msra.mxu0 %v2009
        %2113 = vmatprep.subr.bf16.mxu0 0
        %2114 = vmatpush2.bf16.msra.mxu0 %v2008
        %2115 = vmatprep.subr.bf16.mxu0 0
        %2116 = vmatpush2.bf16.msra.mxu0 %v2007
        %2117 = vmatprep.subr.bf16.mxu0 0
        %2118 = vmatpush2.bf16.msra.mxu0 %v2006
        %2119 = vmatprep.mubr.bf16.mxu0 %v1789
        %2120 = vmatmul.mubr.bf16.gmra.mxu0 %v1788
        %v2121 = vpop.f32.mrf.mxu0
        %v2122 = vadd.f32 %v2081, %v2121
        %v2123 = vpop.f32.mrf.mxu0
        %v2124 = vpop.f32.mrf.mxu0
        %v2125 = vadd.f32 %v2084, %v2124
        %v2126 = vpop.f32.mrf.mxu0
        %2127 = vdwg.mxu0
        %v2128 = vadd.f32 %v1258, %v2122
        %v2129 = vadd.f32 %v1259, %v2125
        %2130 = vst [vmem:[%s437] sm:$0xff] %v2128
        %2131 = vst [vmem:[%s437 + $0x8] sm:$0xff] %v2129
        %s2132 = sand.u32 %s231, 1
        %s2133 = scalar_lea.sflag [#allocation4], %s2132
        %s2134 = sand.u32 %s231, 1
        %s2135 = smul.addr %s2134, 16
        %s2136 = scalar_lea.vmem [#allocation14], %s2135
        // Predicated region
        $region85: #{block_forward.1} parent=55 // pred_check
          %p2137 = pneg %p241
        $region86: #{block_forward.1} parent=55 // pred_check_branch
          %2139 = sbr.rel (%p2137) target = $region88
        $region87: #{block_forward.1} parent=55 // pred_region
          %s2141 = ssub.s32 256, 256
          %2142 = vsyncadd %s2133, %s2141
          %s2143 = smul.addr %s29, 2
          %s2144 = smul.addr %s2143, 128
          %s2145 = scalar_lea.hbm %s9, %s2144
          %s2146 = sshll.u32 %s2136, 4
          %s2147 = int_to_ptr.vmem [resolvable:$true] %s2146
          %2152 = dma.vmem_to_hbm [thread:$0]  %s2147, 256, %s2145, %s2133, 128, 128, 8
        $region88: #{block_forward.1} parent=55 // pred_fallthru
          _
      $region56: #{block_forward.1} parent=5 // pred_fallthru
        _
      %p2153 = scmp.le.s32.totalorder 2, %s24
      // Predicated region
      $region89: #{block_forward.1} parent=5 // pred_check
        %p2154 = pneg %p2153
      $region90: #{block_forward.1} parent=5 // pred_check_branch
        %2156 = sbr.rel (%p2154) target = $region92
      $region91: #{block_forward.1} parent=5 // pred_region
        %s2157 = ssub.s32 %s24, 2
        // Predicated region
        $region93: #{block_forward.1} parent=91 // pred_check
          %p2158 = pneg %p247
        $region94: #{block_forward.1} parent=91 // pred_check_branch
          %2160 = sbr.rel (%p2158) target = $region96
        $region95: #{block_forward.1} parent=91 // pred_region
          %s2161 = sand.u32 %s232, 1
          %s2162 = scalar_lea.sflag [#allocation4], %s2161
          %s2163 = sand.u32 %s232, 1
          %s2164 = smul.addr %s2163, 16
          %s2165 = scalar_lea.vmem [#allocation14], %s2164
          %2166 = dma.done %s2162, 256
        $region96: #{block_forward.1} parent=91 // pred_fallthru
          _
      $region92: #{block_forward.1} parent=5 // pred_fallthru
        _
    $region6: #{block_forward.1} parent=1 // loop_footer
      %s28 = sadd.s32 1, %s24
    $region7: #{block_forward.1} parent=1 // loop_footer_branch
      %23 = sbr.rel target = $region3
    $region8: #{block_forward.1} parent=1 // loop_exit
      _
    %2167 = vsyncpa [#allocation3], 1
    %s2168 = scalar_lea.sflag [#allocation3], 1
    %2169 = vsyncpa %s2168, 1
    %2170 = vsyncpa [#allocation6], 1
    %2171 = vsyncpa [#allocation9], 1
    %2172 = vsyncpa [#allocation12], 1
    %2173 = vsyncpa [#allocation4], 1
    %s2174 = scalar_lea.sflag [#allocation4], 1
    %2175 = vsyncpa %s2174, 1

</llo_original>
